<compile_context>
chip_gen: v6e
topology: v6e:2x2x1
jax: 0.10.0
libtpu: 0.0.40
codegen_flags: <defaults>
</compile_context>

<pallas_src>
import jax
import jax.numpy as jnp
from jax.experimental import pallas as pl
from jax.experimental.pallas import tpu as pltpu


# VMEM accounting: a 32 MiB scoped limit is safe on every current generation
# (v5e/v6e: 128 MiB physical, 16/32 MiB scoped default; v7x: 64 MiB physical,
# so keep any future bump of these budgets <= ~48 MiB for v7x headroom).
_VMEM_LIMIT_BYTES = 32 * 1024 * 1024
_TILE_BUDGET_BYTES = 12 * 1024 * 1024   # x + out tiles, double-buffered


def _sublane_multiple(itemsize):
    # f32 -> 8, bf16 -> 16, int8/fp8 -> 32 (sub-32-bit packs along sublanes)
    return 8 * max(1, 4 // itemsize)


def _pick_tile_rows(rows, cols, itemsize):
    """Row-tile size for the (rows, cols) elementwise problem.

    Largest multiple of the sublane quantum such that
      * double-buffered x + out tiles stay inside the tile budget, and
      * there are at least 2 grid steps when the input is big enough, so the
        pipeline has something to overlap and v7x's 2 TCs both get a step.
    """
    sub = _sublane_multiple(itemsize)
    cols_pad = pl.cdiv(cols, 128) * 128          # lane padding inside VMEM
    row_bytes = cols_pad * itemsize
    # two streams (x in, out) x double buffering -> 4 tiles live at once
    cap = _TILE_BUDGET_BYTES // (4 * row_bytes)
    cap = max(sub, (cap // sub) * sub)
    half = pl.cdiv(pl.cdiv(rows, 2), sub) * sub  # ~half the rows, sublane-aligned
    tile = min(cap, max(sub, half))
    if tile >= rows:
        return rows                              # tiny input: one full block
    return tile


def _se_scale_kernel(gate_ref, x_ref, o_ref):
    # gate_ref: (tile_rows, 1)   x_ref / o_ref: (tile_rows, HW)
    g = gate_ref[...].astype(jnp.float32)
    # Exact sigmoid (divide instead of the EUP approx reciprocal) so the
    # result matches the f32 reference to ~1e-6; the kernel is HBM-bound so
    # the divide is hidden anyway.  approx=True is a free alternative when
    # looser numerics are acceptable.
    s = pl.reciprocal(1.0 + jnp.exp(-g), approx=False)
    # The scale column broadcasts across the lane (H*W) axis; multiply in the
    # feature dtype so bf16 inputs stay bf16 on the VPU.
    o_ref[...] = (s.astype(x_ref.dtype) * x_ref[...]).astype(o_ref.dtype)


def se_scale(gate, x):
    """gate: (N, C, 1, 1); x: (N, C, H, W) NCHW.  Returns sigmoid(gate) * x."""
    N, C, H, W = x.shape
    assert gate.shape == (N, C, 1, 1), gate.shape
    rows, cols = N * C, H * W
    itemsize = jnp.dtype(x.dtype).itemsize

    # Free, contiguous reshapes (no transpose / relayout HBM passes).
    x2 = x.reshape(rows, cols)
    g2 = gate.reshape(rows, 1)

    tile_rows = _pick_tile_rows(rows, cols, itemsize)
    grid = (pl.cdiv(rows, tile_rows),)

    out2 = pl.pallas_call(
        _se_scale_kernel,
        out_shape=jax.ShapeDtypeStruct((rows, cols), x.dtype),
        grid_spec=pltpu.PrefetchScalarGridSpec(
            num_scalar_prefetch=0,
            grid=grid,
            in_specs=[
                pl.BlockSpec((tile_rows, 1), lambda r: (r, 0)),      # gate col
                pl.BlockSpec((tile_rows, cols), lambda r: (r, 0)),   # x tile
            ],
            out_specs=pl.BlockSpec((tile_rows, cols), lambda r: (r, 0)),
        ),
        compiler_params=pltpu.CompilerParams(
            dimension_semantics=("parallel",),
            vmem_limit_bytes=_VMEM_LIMIT_BYTES,
        ),
    )(g2, x2)

    return out2.reshape(N, C, H, W)


# TODO(synk): for tensors this small (~357 KB for the spec shape) the right
# production answer is to fuse this multiply into the producing conv's epilogue
# (or let XLA emit one fused elementwise pass); the standalone pallas_call is
# kept here to match the module boundary.


if __name__ == "__main__":
    key = jax.random.PRNGKey(0)
    k1, k2, k3, k4 = jax.random.split(key, 4)

    # Spec shapes: x580 (1, 1824, 7, 7) features, x584 (1, 1824, 1, 1) gate.
    N, C, H, W = 1, 1824, 7, 7
    x580 = jax.random.normal(k1, (N, C, H, W), dtype=jnp.float32)
    x584 = jax.random.normal(k2, (N, C, 1, 1), dtype=jnp.float32)

    out = jax.block_until_ready(se_scale(x584, x580))
    ref = jax.nn.sigmoid(x584) * x580
    assert out.shape == ref.shape == (N, C, H, W)
    assert jnp.allclose(out, ref, atol=1e-6, rtol=1e-6)

    # Smaller odd-shaped case exercises the ragged last row-block path.
    n2, c2, h2, w2 = 2, 52, 5, 5
    xs = jax.random.normal(k3, (n2, c2, h2, w2), dtype=jnp.float32)
    gs = jax.random.normal(k4, (n2, c2, 1, 1), dtype=jnp.float32)
    outs = jax.block_until_ready(se_scale(gs, xs))
    refs = jax.nn.sigmoid(gs) * xs
    assert jnp.allclose(outs, refs, atol=1e-6, rtol=1e-6)

    print("KERNEL_OK")
</pallas_src>

<mosaic_0001>
module attributes {stable_mosaic.version = 11 : i64} {
  func.func @_se_scale_kernel(%arg0: i32, %arg1: memref<912x1xf32, #tpu.memory_space<vmem>>, %arg2: memref<912x49xf32, #tpu.memory_space<vmem>>, %arg3: memref<912x49xf32, #tpu.memory_space<vmem>>) attributes {dimension_semantics = [#tpu.dimension_semantics<parallel>], iteration_bounds = array<i64: 2>, scalar_prefetch = 0 : i64, scratch_operands = 0 : i64, tpu.core_type = #tpu.core_type<tc>, window_params = [{transform_indices = @transform_0, window_bounds = array<i64: 912, 1>}, {transform_indices = @transform_1, window_bounds = array<i64: 912, 49>}, {transform_indices = @transform_2, window_bounds = array<i64: 912, 49>}]} {
    %c0 = arith.constant 0 : index
    %c0_0 = arith.constant 0 : index
    %0 = vector.load %arg1[%c0, %c0_0] : memref<912x1xf32, #tpu.memory_space<vmem>>, vector<912x1xf32>
    %cst = arith.constant 0.000000e+00 : f32
    %1 = vector.broadcast %cst : f32 to vector<912x1xf32>
    %2 = arith.subf %1, %0 : vector<912x1xf32>
    %3 = math.exp %2 : vector<912x1xf32>
    %cst_1 = arith.constant 1.000000e+00 : f32
    %4 = vector.broadcast %cst_1 : f32 to vector<912x1xf32>
    %5 = arith.addf %4, %3 : vector<912x1xf32>
    %6 = tpu.reciprocal %5 : vector<912x1xf32> -> vector<912x1xf32>
    %c0_2 = arith.constant 0 : index
    %c0_3 = arith.constant 0 : index
    %7 = vector.load %arg2[%c0_2, %c0_3] : memref<912x49xf32, #tpu.memory_space<vmem>>, vector<912x49xf32>
    %8 = vector.broadcast %6 : vector<912x1xf32> to vector<912x49xf32>
    %9 = arith.mulf %8, %7 : vector<912x49xf32>
    %c0_4 = arith.constant 0 : index
    %c0_5 = arith.constant 0 : index
    %10 = vector.load %arg3[%c0_4, %c0_5] : memref<912x49xf32, #tpu.memory_space<vmem>>, vector<912x49xf32>
    tpu.vector_store %arg3[%c0_4, %c0_5], %9 {strides = array<i32>} : memref<912x49xf32, #tpu.memory_space<vmem>>, vector<912x49xf32>,
    return
  }
  func.func @transform_0(%arg0: i32) -> (i32, i32) {
    %c0_i32 = arith.constant 0 : i32
    %c0_i32_0 = arith.constant 0 : i32
    return %arg0, %c0_i32 : i32, i32
  }
  func.func @transform_1(%arg0: i32) -> (i32, i32) {
    %c0_i32 = arith.constant 0 : i32
    %c0_i32_0 = arith.constant 0 : i32
    return %arg0, %c0_i32 : i32, i32
  }
  func.func @transform_2(%arg0: i32) -> (i32, i32) {
    %c0_i32 = arith.constant 0 : i32
    %c0_i32_0 = arith.constant 0 : i32
    return %arg0, %c0_i32 : i32, i32
  }
}

</mosaic_0001>

<llo_original>
// kernel: tpu_custom_call.1
$region0: #{tpu_custom_call.1}
  #allocation0 [shape = 'u32[]', space=smem, size = 0x4, offset = 0x4, fixed_abs, tag = 'smem constant byte address 0x4 - core index']
  #allocation1 [shape = 'u32[144,128]{1,0:T(1,128)}', space=vmem, size = 0x12000, scoped, tag = 'internal scratch']
  %s0 = inlined_call_operand.vmem [shape: f32[1824,1], index: 0, kind: input, shape index: {}]
  %s1 = inlined_call_operand.vmem [shape: f32[1824,49], index: 1, kind: input, shape index: {}]
  %s2 = inlined_call_operand.vmem [shape: f32[1824,49], index: 2, kind: output, shape index: {}]
  %s3 = sld [smem:[#allocation0]]
  $region41: #{tpu_custom_call.1} parent=0
    _
  %s5 = ssub.s32 1, %s3
  %s6 = scalar_select 0, %s5, %s3
  loop: start=0, step=1, limit=4
  $region2: #{tpu_custom_call.1} parent=0 // loop_pre_header
    _
  $region3: #{tpu_custom_call.1} parent=0 // loop_header
    %s8 = sphi 0, %s12
    %p9 = scmp.ge.s32.totalorder %s8, 4
    %s18 = sphi 0, %s20
    %s21 = sphi 0, %s18
    %s22 = sphi 0, %s21
    %s38 = sphi 0, %s22
    %s44 = sphi 0, %s46
    %s47 = sphi 0, %s44
    %s48 = sphi 0, %s47
    %s64 = sphi 0, %s48
    %s70 = sphi 0, %s72
    %s73 = sphi 0, %s70
    %s74 = sphi 0, %s73
    %s90 = sphi 0, %s74
  $region4: #{tpu_custom_call.1} parent=0 // loop_header_branch
    %11 = sbr.rel (%p9) target = $region8
  $region5: #{tpu_custom_call.1} parent=0 // loop_body
    %s13 = ssub.s32 %s8, 1
    %s14 = ssub.s32 %s8, 2
    %s15 = sadd.s32 %s8, 1
    %s16 = ssub.s32 %s8, %s15
    %p17 = scmp.eq.s32.totalorder %s16, 0
    %s19 = sadd.s32 %s18, 1
    %s20 = scalar_select %p17, %s18, %s19
    %p23 = pneg %p17
    %p24 = scmp.eq.s32.totalorder %s8, 1
    %p25 = por %p23, %p24
    %p26 = scmp.ne.s32.totalorder %s18, %s21
    %p27 = scmp.eq.s32.totalorder %s8, 0
    %p28 = por %p26, %p27
    %p29 = scmp.ne.s32.totalorder %s18, %s21
    %p30 = scmp.eq.s32.totalorder %s13, 1
    %p31 = por %p29, %p30
    %p32 = scmp.ne.s32.totalorder %s21, %s22
    %p33 = scmp.eq.s32.totalorder %s13, 0
    %p34 = por %p32, %p33
    %p35 = scmp.ne.s32.totalorder %s21, %s22
    %p36 = scmp.eq.s32.totalorder %s14, 1
    %p37 = por %p35, %p36
    %p39 = scmp.ne.s32.totalorder %s22, %s38
    %p40 = scmp.eq.s32.totalorder %s14, 0
    %p41 = por %p39, %p40
    %s42 = ssub.s32 %s8, %s15
    %p43 = scmp.eq.s32.totalorder %s42, 0
    %s45 = sadd.s32 %s44, 1
    %s46 = scalar_select %p43, %s44, %s45
    %p49 = pneg %p43
    %p50 = scmp.eq.s32.totalorder %s8, 1
    %p51 = por %p49, %p50
    %p52 = scmp.ne.s32.totalorder %s44, %s47
    %p53 = scmp.eq.s32.totalorder %s8, 0
    %p54 = por %p52, %p53
    %p55 = scmp.ne.s32.totalorder %s44, %s47
    %p56 = scmp.eq.s32.totalorder %s13, 1
    %p57 = por %p55, %p56
    %p58 = scmp.ne.s32.totalorder %s47, %s48
    %p59 = scmp.eq.s32.totalorder %s13, 0
    %p60 = por %p58, %p59
    %p61 = scmp.ne.s32.totalorder %s47, %s48
    %p62 = scmp.eq.s32.totalorder %s14, 1
    %p63 = por %p61, %p62
    %p65 = scmp.ne.s32.totalorder %s48, %s64
    %p66 = scmp.eq.s32.totalorder %s14, 0
    %p67 = por %p65, %p66
    %s68 = ssub.s32 %s8, %s15
    %p69 = scmp.eq.s32.totalorder %s68, 0
    %s71 = sadd.s32 %s70, 1
    %s72 = scalar_select %p69, %s70, %s71
    %p75 = pneg %p69
    %p76 = scmp.eq.s32.totalorder %s8, 1
    %p77 = por %p75, %p76
    %p78 = scmp.ne.s32.totalorder %s70, %s73
    %p79 = scmp.eq.s32.totalorder %s8, 0
    %p80 = por %p78, %p79
    %p81 = scmp.ne.s32.totalorder %s70, %s73
    %p82 = scmp.eq.s32.totalorder %s13, 1
    %p83 = por %p81, %p82
    %p84 = scmp.ne.s32.totalorder %s73, %s74
    %p85 = scmp.eq.s32.totalorder %s13, 0
    %p86 = por %p84, %p85
    %p87 = scmp.ne.s32.totalorder %s73, %s74
    %p88 = scmp.eq.s32.totalorder %s14, 1
    %p89 = por %p87, %p88
    %p91 = scmp.ne.s32.totalorder %s74, %s90
    %p92 = scmp.eq.s32.totalorder %s14, 0
    %p93 = por %p91, %p92
    %p94 = scmp.le.s32.totalorder 1, %s8
    %p95 = scmp.lt.s32.totalorder %s8, 3
    %p96 = pnand %p94, %p95
    %p97 = pneg %p96
    // Predicated region
    $region9: #{tpu_custom_call.1} parent=5 // pred_check
      _
    $region10: #{tpu_custom_call.1} parent=5 // pred_check_branch
      %99 = sbr.rel (%p96) target = $region12
    $region11: #{tpu_custom_call.1} parent=5 // pred_region
      %s100 = ssub.s32 %s8, 1
    $region12: #{tpu_custom_call.1} parent=5 // pred_fallthru
      _
    %p101 = scmp.lt.s32.totalorder %s8, 2
    // Predicated region
    $region13: #{tpu_custom_call.1} parent=5 // pred_check
      %p102 = pneg %p101
    $region14: #{tpu_custom_call.1} parent=5 // pred_check_branch
      %104 = sbr.rel (%p102) target = $region16
    $region15: #{tpu_custom_call.1} parent=5 // pred_region
      // Predicated region
      $region17: #{tpu_custom_call.1} parent=15 // pred_check
        %p105 = pneg %p28
      $region18: #{tpu_custom_call.1} parent=15 // pred_check_branch
        %107 = sbr.rel (%p105) target = $region20
      $region19: #{tpu_custom_call.1} parent=15 // pred_region
        %s108 = smul.u32 114, %s8
        %p109 = scmp.lt.s32.totalorder %s108, 227
        %s110 = scalar_select %p109, %s108, 227
        %s111 = smul.addr %s110, 8
        %s112 = scalar_lea.vmem %s0, %s111
        %s113 = smul.u32 114, %s8
      $region20: #{tpu_custom_call.1} parent=15 // pred_fallthru
        _
      // Predicated region
      $region21: #{tpu_custom_call.1} parent=15 // pred_check
        %p114 = pneg %p54
      $region22: #{tpu_custom_call.1} parent=15 // pred_check_branch
        %116 = sbr.rel (%p114) target = $region24
      $region23: #{tpu_custom_call.1} parent=15 // pred_region
        %s117 = smul.u32 114, %s8
        %p118 = scmp.lt.s32.totalorder %s117, 227
        %s119 = scalar_select %p118, %s117, 227
        %s120 = smul.addr %s119, 8
        %s121 = scalar_lea.vmem %s1, %s120
        %s122 = smul.u32 114, %s8
      $region24: #{tpu_custom_call.1} parent=15 // pred_fallthru
        _
    $region16: #{tpu_custom_call.1} parent=5 // pred_fallthru
      _
    %p123 = scmp.le.s32.totalorder 1, %s8
    %p124 = scmp.lt.s32.totalorder %s8, 3
    %p125 = pnand %p123, %p124
    %p126 = pneg %p125
    // Predicated region
    $region25: #{tpu_custom_call.1} parent=5 // pred_check
      _
    $region26: #{tpu_custom_call.1} parent=5 // pred_check_branch
      %128 = sbr.rel (%p125) target = $region28
    $region27: #{tpu_custom_call.1} parent=5 // pred_region
      %s129 = ssub.s32 %s8, 1
      %s130 = smul.u32 114, %s13
      %p131 = scmp.lt.s32.totalorder %s130, 227
      %s132 = scalar_select %p131, %s130, 227
      %s133 = smul.addr %s132, 8
      %s134 = scalar_lea.vmem %s0, %s133
      %p135 = pneg %p34
      %p136 = pneg %p31
      %s137 = smul.u32 114, %s13
      %p138 = scmp.lt.s32.totalorder %s137, 227
      %s139 = scalar_select %p138, %s137, 227
      %s140 = smul.addr %s139, 8
      %s141 = scalar_lea.vmem %s1, %s140
      %p142 = pneg %p60
      %p143 = pneg %p57
      %p144 = pneg %p86
      %p145 = pneg %p83
      %s146 = smul.u32 114, %s13
      %p147 = scmp.lt.s32.totalorder %s146, 227
      %s148 = scalar_select %p147, %s146, 227
      %s149 = smul.addr %s148, 8
      %s150 = scalar_lea.vmem %s2, %s149
      %s151 = smul.u32 114, %s13
      %p152 = scmp.lt.s32.totalorder %s151, 227
      %s153 = scalar_select %p152, %s151, 227
      %s154 = smul.addr %s153, 8
      %s155 = scalar_lea.vmem %s0, %s154
      %s156 = smul.u32 114, %s13
      %s157 = smul.u32 114, %s13
      %p158 = scmp.lt.s32.totalorder %s157, 227
      %s159 = scalar_select %p158, %s157, 227
      %s160 = smul.addr %s159, 8
      %s161 = scalar_lea.vmem %s1, %s160
      %s162 = smul.u32 114, %s13
      %s163 = smul.u32 114, %s13
      %p164 = scmp.lt.s32.totalorder %s163, 227
      %s165 = scalar_select %p164, %s163, 227
      %s166 = smul.addr %s165, 8
      %s167 = scalar_lea.vmem %s2, %s166
      %s168 = smul.u32 114, %s13
      %v169 = vld [vmem:[%s155] sm:$0xff]
      %v170 = vld [vmem:[%s155 + $0x8] sm:$0xff]
      %v171 = vld [vmem:[%s155 + $0x10] sm:$0xff]
      %v172 = vld [vmem:[%s155 + $0x18] sm:$0xff]
      %v173 = vld [vmem:[%s155 + $0x20] sm:$0xff]
      %v174 = vld [vmem:[%s155 + $0x28] sm:$0xff]
      %v175 = vld [vmem:[%s155 + $0x30] sm:$0xff]
      %v176 = vld [vmem:[%s155 + $0x38] sm:$0xff]
      %v177 = vld [vmem:[%s155 + $0x40] sm:$0xff]
      %v178 = vld [vmem:[%s155 + $0x48] sm:$0xff]
      %v179 = vld [vmem:[%s155 + $0x50] sm:$0xff]
      %v180 = vld [vmem:[%s155 + $0x58] sm:$0xff]
      %v181 = vld [vmem:[%s155 + $0x60] sm:$0xff]
      %v182 = vld [vmem:[%s155 + $0x68] sm:$0xff]
      %v183 = vld [vmem:[%s155 + $0x70] sm:$0xff]
      %v184 = vld [vmem:[%s155 + $0x78] sm:$0xff]
      %v185 = vld [vmem:[%s155 + $0x80] sm:$0xff]
      %v186 = vld [vmem:[%s155 + $0x88] sm:$0xff]
      %v187 = vld [vmem:[%s155 + $0x90] sm:$0xff]
      %v188 = vld [vmem:[%s155 + $0x98] sm:$0xff]
      %v189 = vld [vmem:[%s155 + $0xa0] sm:$0xff]
      %v190 = vld [vmem:[%s155 + $0xa8] sm:$0xff]
      %v191 = vld [vmem:[%s155 + $0xb0] sm:$0xff]
      %v192 = vld [vmem:[%s155 + $0xb8] sm:$0xff]
      %v193 = vld [vmem:[%s155 + $0xc0] sm:$0xff]
      %v194 = vld [vmem:[%s155 + $0xc8] sm:$0xff]
      %v195 = vld [vmem:[%s155 + $0xd0] sm:$0xff]
      %v196 = vld [vmem:[%s155 + $0xd8] sm:$0xff]
      %v197 = vld [vmem:[%s155 + $0xe0] sm:$0xff]
      %v198 = vld [vmem:[%s155 + $0xe8] sm:$0xff]
      %v199 = vld [vmem:[%s155 + $0xf0] sm:$0xff]
      %v200 = vld [vmem:[%s155 + $0xf8] sm:$0xff]
      %v201 = vld [vmem:[%s155 + $0x100] sm:$0xff]
      %v202 = vld [vmem:[%s155 + $0x108] sm:$0xff]
      %v203 = vld [vmem:[%s155 + $0x110] sm:$0xff]
      %v204 = vld [vmem:[%s155 + $0x118] sm:$0xff]
      %v205 = vld [vmem:[%s155 + $0x120] sm:$0xff]
      %v206 = vld [vmem:[%s155 + $0x128] sm:$0xff]
      %v207 = vld [vmem:[%s155 + $0x130] sm:$0xff]
      %v208 = vld [vmem:[%s155 + $0x138] sm:$0xff]
      %v209 = vld [vmem:[%s155 + $0x140] sm:$0xff]
      %v210 = vld [vmem:[%s155 + $0x148] sm:$0xff]
      %v211 = vld [vmem:[%s155 + $0x150] sm:$0xff]
      %v212 = vld [vmem:[%s155 + $0x158] sm:$0xff]
      %v213 = vld [vmem:[%s155 + $0x160] sm:$0xff]
      %v214 = vld [vmem:[%s155 + $0x168] sm:$0xff]
      %v215 = vld [vmem:[%s155 + $0x170] sm:$0xff]
      %v216 = vld [vmem:[%s155 + $0x178] sm:$0xff]
      %v217 = vld [vmem:[%s155 + $0x180] sm:$0xff]
      %v218 = vld [vmem:[%s155 + $0x188] sm:$0xff]
      %v219 = vld [vmem:[%s155 + $0x190] sm:$0xff]
      %v220 = vld [vmem:[%s155 + $0x198] sm:$0xff]
      %v221 = vld [vmem:[%s155 + $0x1a0] sm:$0xff]
      %v222 = vld [vmem:[%s155 + $0x1a8] sm:$0xff]
      %v223 = vld [vmem:[%s155 + $0x1b0] sm:$0xff]
      %v224 = vld [vmem:[%s155 + $0x1b8] sm:$0xff]
      %v225 = vld [vmem:[%s155 + $0x1c0] sm:$0xff]
      %v226 = vld [vmem:[%s155 + $0x1c8] sm:$0xff]
      %v227 = vld [vmem:[%s155 + $0x1d0] sm:$0xff]
      %v228 = vld [vmem:[%s155 + $0x1d8] sm:$0xff]
      %v229 = vld [vmem:[%s155 + $0x1e0] sm:$0xff]
      %v230 = vld [vmem:[%s155 + $0x1e8] sm:$0xff]
      %v231 = vld [vmem:[%s155 + $0x1f0] sm:$0xff]
      %v232 = vld [vmem:[%s155 + $0x1f8] sm:$0xff]
      %v233 = vld [vmem:[%s155 + $0x200] sm:$0xff]
      %v234 = vld [vmem:[%s155 + $0x208] sm:$0xff]
      %v235 = vld [vmem:[%s155 + $0x210] sm:$0xff]
      %v236 = vld [vmem:[%s155 + $0x218] sm:$0xff]
      %v237 = vld [vmem:[%s155 + $0x220] sm:$0xff]
      %v238 = vld [vmem:[%s155 + $0x228] sm:$0xff]
      %v239 = vld [vmem:[%s155 + $0x230] sm:$0xff]
      %v240 = vld [vmem:[%s155 + $0x238] sm:$0xff]
      %v241 = vld [vmem:[%s155 + $0x240] sm:$0xff]
      %v242 = vld [vmem:[%s155 + $0x248] sm:$0xff]
      %v243 = vld [vmem:[%s155 + $0x250] sm:$0xff]
      %v244 = vld [vmem:[%s155 + $0x258] sm:$0xff]
      %v245 = vld [vmem:[%s155 + $0x260] sm:$0xff]
      %v246 = vld [vmem:[%s155 + $0x268] sm:$0xff]
      %v247 = vld [vmem:[%s155 + $0x270] sm:$0xff]
      %v248 = vld [vmem:[%s155 + $0x278] sm:$0xff]
      %v249 = vld [vmem:[%s155 + $0x280] sm:$0xff]
      %v250 = vld [vmem:[%s155 + $0x288] sm:$0xff]
      %v251 = vld [vmem:[%s155 + $0x290] sm:$0xff]
      %v252 = vld [vmem:[%s155 + $0x298] sm:$0xff]
      %v253 = vld [vmem:[%s155 + $0x2a0] sm:$0xff]
      %v254 = vld [vmem:[%s155 + $0x2a8] sm:$0xff]
      %v255 = vld [vmem:[%s155 + $0x2b0] sm:$0xff]
      %v256 = vld [vmem:[%s155 + $0x2b8] sm:$0xff]
      %v257 = vld [vmem:[%s155 + $0x2c0] sm:$0xff]
      %v258 = vld [vmem:[%s155 + $0x2c8] sm:$0xff]
      %v259 = vld [vmem:[%s155 + $0x2d0] sm:$0xff]
      %v260 = vld [vmem:[%s155 + $0x2d8] sm:$0xff]
      %v261 = vld [vmem:[%s155 + $0x2e0] sm:$0xff]
      %v262 = vld [vmem:[%s155 + $0x2e8] sm:$0xff]
      %v263 = vld [vmem:[%s155 + $0x2f0] sm:$0xff]
      %v264 = vld [vmem:[%s155 + $0x2f8] sm:$0xff]
      %v265 = vld [vmem:[%s155 + $0x300] sm:$0xff]
      %v266 = vld [vmem:[%s155 + $0x308] sm:$0xff]
      %v267 = vld [vmem:[%s155 + $0x310] sm:$0xff]
      %v268 = vld [vmem:[%s155 + $0x318] sm:$0xff]
      %v269 = vld [vmem:[%s155 + $0x320] sm:$0xff]
      %v270 = vld [vmem:[%s155 + $0x328] sm:$0xff]
      %v271 = vld [vmem:[%s155 + $0x330] sm:$0xff]
      %v272 = vld [vmem:[%s155 + $0x338] sm:$0xff]
      %v273 = vld [vmem:[%s155 + $0x340] sm:$0xff]
      %v274 = vld [vmem:[%s155 + $0x348] sm:$0xff]
      %v275 = vld [vmem:[%s155 + $0x350] sm:$0xff]
      %v276 = vld [vmem:[%s155 + $0x358] sm:$0xff]
      %v277 = vld [vmem:[%s155 + $0x360] sm:$0xff]
      %v278 = vld [vmem:[%s155 + $0x368] sm:$0xff]
      %v279 = vld [vmem:[%s155 + $0x370] sm:$0xff]
      %v280 = vld [vmem:[%s155 + $0x378] sm:$0xff]
      %v281 = vld [vmem:[%s155 + $0x380] sm:$0xff]
      %v282 = vld [vmem:[%s155 + $0x388] sm:$0xff]
      %v283 = vsub.f32 0.0, %v169
      %v284 = vsub.f32 0.0, %v170
      %v285 = vsub.f32 0.0, %v171
      %v286 = vsub.f32 0.0, %v172
      %v287 = vsub.f32 0.0, %v173
      %v288 = vsub.f32 0.0, %v174
      %v289 = vsub.f32 0.0, %v175
      %v290 = vsub.f32 0.0, %v176
      %v291 = vsub.f32 0.0, %v177
      %v292 = vsub.f32 0.0, %v178
      %v293 = vsub.f32 0.0, %v179
      %v294 = vsub.f32 0.0, %v180
      %v295 = vsub.f32 0.0, %v181
      %v296 = vsub.f32 0.0, %v182
      %v297 = vsub.f32 0.0, %v183
      %v298 = vsub.f32 0.0, %v184
      %v299 = vsub.f32 0.0, %v185
      %v300 = vsub.f32 0.0, %v186
      %v301 = vsub.f32 0.0, %v187
      %v302 = vsub.f32 0.0, %v188
      %v303 = vsub.f32 0.0, %v189
      %v304 = vsub.f32 0.0, %v190
      %v305 = vsub.f32 0.0, %v191
      %v306 = vsub.f32 0.0, %v192
      %v307 = vsub.f32 0.0, %v193
      %v308 = vsub.f32 0.0, %v194
      %v309 = vsub.f32 0.0, %v195
      %v310 = vsub.f32 0.0, %v196
      %v311 = vsub.f32 0.0, %v197
      %v312 = vsub.f32 0.0, %v198
      %v313 = vsub.f32 0.0, %v199
      %v314 = vsub.f32 0.0, %v200
      %v315 = vsub.f32 0.0, %v201
      %v316 = vsub.f32 0.0, %v202
      %v317 = vsub.f32 0.0, %v203
      %v318 = vsub.f32 0.0, %v204
      %v319 = vsub.f32 0.0, %v205
      %v320 = vsub.f32 0.0, %v206
      %v321 = vsub.f32 0.0, %v207
      %v322 = vsub.f32 0.0, %v208
      %v323 = vsub.f32 0.0, %v209
      %v324 = vsub.f32 0.0, %v210
      %v325 = vsub.f32 0.0, %v211
      %v326 = vsub.f32 0.0, %v212
      %v327 = vsub.f32 0.0, %v213
      %v328 = vsub.f32 0.0, %v214
      %v329 = vsub.f32 0.0, %v215
      %v330 = vsub.f32 0.0, %v216
      %v331 = vsub.f32 0.0, %v217
      %v332 = vsub.f32 0.0, %v218
      %v333 = vsub.f32 0.0, %v219
      %v334 = vsub.f32 0.0, %v220
      %v335 = vsub.f32 0.0, %v221
      %v336 = vsub.f32 0.0, %v222
      %v337 = vsub.f32 0.0, %v223
      %v338 = vsub.f32 0.0, %v224
      %v339 = vsub.f32 0.0, %v225
      %v340 = vsub.f32 0.0, %v226
      %v341 = vsub.f32 0.0, %v227
      %v342 = vsub.f32 0.0, %v228
      %v343 = vsub.f32 0.0, %v229
      %v344 = vsub.f32 0.0, %v230
      %v345 = vsub.f32 0.0, %v231
      %v346 = vsub.f32 0.0, %v232
      %v347 = vsub.f32 0.0, %v233
      %v348 = vsub.f32 0.0, %v234
      %v349 = vsub.f32 0.0, %v235
      %v350 = vsub.f32 0.0, %v236
      %v351 = vsub.f32 0.0, %v237
      %v352 = vsub.f32 0.0, %v238
      %v353 = vsub.f32 0.0, %v239
      %v354 = vsub.f32 0.0, %v240
      %v355 = vsub.f32 0.0, %v241
      %v356 = vsub.f32 0.0, %v242
      %v357 = vsub.f32 0.0, %v243
      %v358 = vsub.f32 0.0, %v244
      %v359 = vsub.f32 0.0, %v245
      %v360 = vsub.f32 0.0, %v246
      %v361 = vsub.f32 0.0, %v247
      %v362 = vsub.f32 0.0, %v248
      %v363 = vsub.f32 0.0, %v249
      %v364 = vsub.f32 0.0, %v250
      %v365 = vsub.f32 0.0, %v251
      %v366 = vsub.f32 0.0, %v252
      %v367 = vsub.f32 0.0, %v253
      %v368 = vsub.f32 0.0, %v254
      %v369 = vsub.f32 0.0, %v255
      %v370 = vsub.f32 0.0, %v256
      %v371 = vsub.f32 0.0, %v257
      %v372 = vsub.f32 0.0, %v258
      %v373 = vsub.f32 0.0, %v259
      %v374 = vsub.f32 0.0, %v260
      %v375 = vsub.f32 0.0, %v261
      %v376 = vsub.f32 0.0, %v262
      %v377 = vsub.f32 0.0, %v263
      %v378 = vsub.f32 0.0, %v264
      %v379 = vsub.f32 0.0, %v265
      %v380 = vsub.f32 0.0, %v266
      %v381 = vsub.f32 0.0, %v267
      %v382 = vsub.f32 0.0, %v268
      %v383 = vsub.f32 0.0, %v269
      %v384 = vsub.f32 0.0, %v270
      %v385 = vsub.f32 0.0, %v271
      %v386 = vsub.f32 0.0, %v272
      %v387 = vsub.f32 0.0, %v273
      %v388 = vsub.f32 0.0, %v274
      %v389 = vsub.f32 0.0, %v275
      %v390 = vsub.f32 0.0, %v276
      %v391 = vsub.f32 0.0, %v277
      %v392 = vsub.f32 0.0, %v278
      %v393 = vsub.f32 0.0, %v279
      %v394 = vsub.f32 0.0, %v280
      %v395 = vsub.f32 0.0, %v281
      %v396 = vsub.f32 0.0, %v282
      %v397 = vmul.f32 %v283, 1.442695
      %v398 = vpow.pop %v397
      %v399 = vmul.f32 %v284, 1.442695
      %v400 = vpow.pop %v399
      %v401 = vmul.f32 %v285, 1.442695
      %v402 = vpow.pop %v401
      %v403 = vmul.f32 %v286, 1.442695
      %v404 = vpow.pop %v403
      %v405 = vmul.f32 %v287, 1.442695
      %v406 = vpow.pop %v405
      %v407 = vmul.f32 %v288, 1.442695
      %v408 = vpow.pop %v407
      %v409 = vmul.f32 %v289, 1.442695
      %v410 = vpow.pop %v409
      %v411 = vmul.f32 %v290, 1.442695
      %v412 = vpow.pop %v411
      %v413 = vmul.f32 %v291, 1.442695
      %v414 = vpow.pop %v413
      %v415 = vmul.f32 %v292, 1.442695
      %v416 = vpow.pop %v415
      %v417 = vmul.f32 %v293, 1.442695
      %v418 = vpow.pop %v417
      %v419 = vmul.f32 %v294, 1.442695
      %v420 = vpow.pop %v419
      %v421 = vmul.f32 %v295, 1.442695
      %v422 = vpow.pop %v421
      %v423 = vmul.f32 %v296, 1.442695
      %v424 = vpow.pop %v423
      %v425 = vmul.f32 %v297, 1.442695
      %v426 = vpow.pop %v425
      %v427 = vmul.f32 %v298, 1.442695
      %v428 = vpow.pop %v427
      %v429 = vmul.f32 %v299, 1.442695
      %v430 = vpow.pop %v429
      %v431 = vmul.f32 %v300, 1.442695
      %v432 = vpow.pop %v431
      %v433 = vmul.f32 %v301, 1.442695
      %v434 = vpow.pop %v433
      %v435 = vmul.f32 %v302, 1.442695
      %v436 = vpow.pop %v435
      %v437 = vmul.f32 %v303, 1.442695
      %v438 = vpow.pop %v437
      %v439 = vmul.f32 %v304, 1.442695
      %v440 = vpow.pop %v439
      %v441 = vmul.f32 %v305, 1.442695
      %v442 = vpow.pop %v441
      %v443 = vmul.f32 %v306, 1.442695
      %v444 = vpow.pop %v443
      %v445 = vmul.f32 %v307, 1.442695
      %v446 = vpow.pop %v445
      %v447 = vmul.f32 %v308, 1.442695
      %v448 = vpow.pop %v447
      %v449 = vmul.f32 %v309, 1.442695
      %v450 = vpow.pop %v449
      %v451 = vmul.f32 %v310, 1.442695
      %v452 = vpow.pop %v451
      %v453 = vmul.f32 %v311, 1.442695
      %v454 = vpow.pop %v453
      %v455 = vmul.f32 %v312, 1.442695
      %v456 = vpow.pop %v455
      %v457 = vmul.f32 %v313, 1.442695
      %v458 = vpow.pop %v457
      %v459 = vmul.f32 %v314, 1.442695
      %v460 = vpow.pop %v459
      %v461 = vmul.f32 %v315, 1.442695
      %v462 = vpow.pop %v461
      %v463 = vmul.f32 %v316, 1.442695
      %v464 = vpow.pop %v463
      %v465 = vmul.f32 %v317, 1.442695
      %v466 = vpow.pop %v465
      %v467 = vmul.f32 %v318, 1.442695
      %v468 = vpow.pop %v467
      %v469 = vmul.f32 %v319, 1.442695
      %v470 = vpow.pop %v469
      %v471 = vmul.f32 %v320, 1.442695
      %v472 = vpow.pop %v471
      %v473 = vmul.f32 %v321, 1.442695
      %v474 = vpow.pop %v473
      %v475 = vmul.f32 %v322, 1.442695
      %v476 = vpow.pop %v475
      %v477 = vmul.f32 %v323, 1.442695
      %v478 = vpow.pop %v477
      %v479 = vmul.f32 %v324, 1.442695
      %v480 = vpow.pop %v479
      %v481 = vmul.f32 %v325, 1.442695
      %v482 = vpow.pop %v481
      %v483 = vmul.f32 %v326, 1.442695
      %v484 = vpow.pop %v483
      %v485 = vmul.f32 %v327, 1.442695
      %v486 = vpow.pop %v485
      %v487 = vmul.f32 %v328, 1.442695
      %v488 = vpow.pop %v487
      %v489 = vmul.f32 %v329, 1.442695
      %v490 = vpow.pop %v489
      %v491 = vmul.f32 %v330, 1.442695
      %v492 = vpow.pop %v491
      %v493 = vmul.f32 %v331, 1.442695
      %v494 = vpow.pop %v493
      %v495 = vmul.f32 %v332, 1.442695
      %v496 = vpow.pop %v495
      %v497 = vmul.f32 %v333, 1.442695
      %v498 = vpow.pop %v497
      %v499 = vmul.f32 %v334, 1.442695
      %v500 = vpow.pop %v499
      %v501 = vmul.f32 %v335, 1.442695
      %v502 = vpow.pop %v501
      %v503 = vmul.f32 %v336, 1.442695
      %v504 = vpow.pop %v503
      %v505 = vmul.f32 %v337, 1.442695
      %v506 = vpow.pop %v505
      %v507 = vmul.f32 %v338, 1.442695
      %v508 = vpow.pop %v507
      %v509 = vmul.f32 %v339, 1.442695
      %v510 = vpow.pop %v509
      %v511 = vmul.f32 %v340, 1.442695
      %v512 = vpow.pop %v511
      %v513 = vmul.f32 %v341, 1.442695
      %v514 = vpow.pop %v513
      %v515 = vmul.f32 %v342, 1.442695
      %v516 = vpow.pop %v515
      %v517 = vmul.f32 %v343, 1.442695
      %v518 = vpow.pop %v517
      %v519 = vmul.f32 %v344, 1.442695
      %v520 = vpow.pop %v519
      %v521 = vmul.f32 %v345, 1.442695
      %v522 = vpow.pop %v521
      %v523 = vmul.f32 %v346, 1.442695
      %v524 = vpow.pop %v523
      %v525 = vmul.f32 %v347, 1.442695
      %v526 = vpow.pop %v525
      %v527 = vmul.f32 %v348, 1.442695
      %v528 = vpow.pop %v527
      %v529 = vmul.f32 %v349, 1.442695
      %v530 = vpow.pop %v529
      %v531 = vmul.f32 %v350, 1.442695
      %v532 = vpow.pop %v531
      %v533 = vmul.f32 %v351, 1.442695
      %v534 = vpow.pop %v533
      %v535 = vmul.f32 %v352, 1.442695
      %v536 = vpow.pop %v535
      %v537 = vmul.f32 %v353, 1.442695
      %v538 = vpow.pop %v537
      %v539 = vmul.f32 %v354, 1.442695
      %v540 = vpow.pop %v539
      %v541 = vmul.f32 %v355, 1.442695
      %v542 = vpow.pop %v541
      %v543 = vmul.f32 %v356, 1.442695
      %v544 = vpow.pop %v543
      %v545 = vmul.f32 %v357, 1.442695
      %v546 = vpow.pop %v545
      %v547 = vmul.f32 %v358, 1.442695
      %v548 = vpow.pop %v547
      %v549 = vmul.f32 %v359, 1.442695
      %v550 = vpow.pop %v549
      %v551 = vmul.f32 %v360, 1.442695
      %v552 = vpow.pop %v551
      %v553 = vmul.f32 %v361, 1.442695
      %v554 = vpow.pop %v553
      %v555 = vmul.f32 %v362, 1.442695
      %v556 = vpow.pop %v555
      %v557 = vmul.f32 %v363, 1.442695
      %v558 = vpow.pop %v557
      %v559 = vmul.f32 %v364, 1.442695
      %v560 = vpow.pop %v559
      %v561 = vmul.f32 %v365, 1.442695
      %v562 = vpow.pop %v561
      %v563 = vmul.f32 %v366, 1.442695
      %v564 = vpow.pop %v563
      %v565 = vmul.f32 %v367, 1.442695
      %v566 = vpow.pop %v565
      %v567 = vmul.f32 %v368, 1.442695
      %v568 = vpow.pop %v567
      %v569 = vmul.f32 %v369, 1.442695
      %v570 = vpow.pop %v569
      %v571 = vmul.f32 %v370, 1.442695
      %v572 = vpow.pop %v571
      %v573 = vmul.f32 %v371, 1.442695
      %v574 = vpow.pop %v573
      %v575 = vmul.f32 %v372, 1.442695
      %v576 = vpow.pop %v575
      %v577 = vmul.f32 %v373, 1.442695
      %v578 = vpow.pop %v577
      %v579 = vmul.f32 %v374, 1.442695
      %v580 = vpow.pop %v579
      %v581 = vmul.f32 %v375, 1.442695
      %v582 = vpow.pop %v581
      %v583 = vmul.f32 %v376, 1.442695
      %v584 = vpow.pop %v583
      %v585 = vmul.f32 %v377, 1.442695
      %v586 = vpow.pop %v585
      %v587 = vmul.f32 %v378, 1.442695
      %v588 = vpow.pop %v587
      %v589 = vmul.f32 %v379, 1.442695
      %v590 = vpow.pop %v589
      %v591 = vmul.f32 %v380, 1.442695
      %v592 = vpow.pop %v591
      %v593 = vmul.f32 %v381, 1.442695
      %v594 = vpow.pop %v593
      %v595 = vmul.f32 %v382, 1.442695
      %v596 = vpow.pop %v595
      %v597 = vmul.f32 %v383, 1.442695
      %v598 = vpow.pop %v597
      %v599 = vmul.f32 %v384, 1.442695
      %v600 = vpow.pop %v599
      %v601 = vmul.f32 %v385, 1.442695
      %v602 = vpow.pop %v601
      %v603 = vmul.f32 %v386, 1.442695
      %v604 = vpow.pop %v603
      %v605 = vmul.f32 %v387, 1.442695
      %v606 = vpow.pop %v605
      %v607 = vmul.f32 %v388, 1.442695
      %v608 = vpow.pop %v607
      %v609 = vmul.f32 %v389, 1.442695
      %v610 = vpow.pop %v609
      %v611 = vmul.f32 %v390, 1.442695
      %v612 = vpow.pop %v611
      %v613 = vmul.f32 %v391, 1.442695
      %v614 = vpow.pop %v613
      %v615 = vmul.f32 %v392, 1.442695
      %v616 = vpow.pop %v615
      %v617 = vmul.f32 %v393, 1.442695
      %v618 = vpow.pop %v617
      %v619 = vmul.f32 %v394, 1.442695
      %v620 = vpow.pop %v619
      %v621 = vmul.f32 %v395, 1.442695
      %v622 = vpow.pop %v621
      %v623 = vmul.f32 %v396, 1.442695
      %v624 = vpow.pop %v623
      %v625 = vadd.f32 %v398, 1.0
      %v626 = vadd.f32 %v400, 1.0
      %v627 = vadd.f32 %v402, 1.0
      %v628 = vadd.f32 %v404, 1.0
      %v629 = vadd.f32 %v406, 1.0
      %v630 = vadd.f32 %v408, 1.0
      %v631 = vadd.f32 %v410, 1.0
      %v632 = vadd.f32 %v412, 1.0
      %v633 = vadd.f32 %v414, 1.0
      %v634 = vadd.f32 %v416, 1.0
      %v635 = vadd.f32 %v418, 1.0
      %v636 = vadd.f32 %v420, 1.0
      %v637 = vadd.f32 %v422, 1.0
      %v638 = vadd.f32 %v424, 1.0
      %v639 = vadd.f32 %v426, 1.0
      %v640 = vadd.f32 %v428, 1.0
      %v641 = vadd.f32 %v430, 1.0
      %v642 = vadd.f32 %v432, 1.0
      %v643 = vadd.f32 %v434, 1.0
      %v644 = vadd.f32 %v436, 1.0
      %v645 = vadd.f32 %v438, 1.0
      %v646 = vadd.f32 %v440, 1.0
      %v647 = vadd.f32 %v442, 1.0
      %v648 = vadd.f32 %v444, 1.0
      %v649 = vadd.f32 %v446, 1.0
      %v650 = vadd.f32 %v448, 1.0
      %v651 = vadd.f32 %v450, 1.0
      %v652 = vadd.f32 %v452, 1.0
      %v653 = vadd.f32 %v454, 1.0
      %v654 = vadd.f32 %v456, 1.0
      %v655 = vadd.f32 %v458, 1.0
      %v656 = vadd.f32 %v460, 1.0
      %v657 = vadd.f32 %v462, 1.0
      %v658 = vadd.f32 %v464, 1.0
      %v659 = vadd.f32 %v466, 1.0
      %v660 = vadd.f32 %v468, 1.0
      %v661 = vadd.f32 %v470, 1.0
      %v662 = vadd.f32 %v472, 1.0
      %v663 = vadd.f32 %v474, 1.0
      %v664 = vadd.f32 %v476, 1.0
      %v665 = vadd.f32 %v478, 1.0
      %v666 = vadd.f32 %v480, 1.0
      %v667 = vadd.f32 %v482, 1.0
      %v668 = vadd.f32 %v484, 1.0
      %v669 = vadd.f32 %v486, 1.0
      %v670 = vadd.f32 %v488, 1.0
      %v671 = vadd.f32 %v490, 1.0
      %v672 = vadd.f32 %v492, 1.0
      %v673 = vadd.f32 %v494, 1.0
      %v674 = vadd.f32 %v496, 1.0
      %v675 = vadd.f32 %v498, 1.0
      %v676 = vadd.f32 %v500, 1.0
      %v677 = vadd.f32 %v502, 1.0
      %v678 = vadd.f32 %v504, 1.0
      %v679 = vadd.f32 %v506, 1.0
      %v680 = vadd.f32 %v508, 1.0
      %v681 = vadd.f32 %v510, 1.0
      %v682 = vadd.f32 %v512, 1.0
      %v683 = vadd.f32 %v514, 1.0
      %v684 = vadd.f32 %v516, 1.0
      %v685 = vadd.f32 %v518, 1.0
      %v686 = vadd.f32 %v520, 1.0
      %v687 = vadd.f32 %v522, 1.0
      %v688 = vadd.f32 %v524, 1.0
      %v689 = vadd.f32 %v526, 1.0
      %v690 = vadd.f32 %v528, 1.0
      %v691 = vadd.f32 %v530, 1.0
      %v692 = vadd.f32 %v532, 1.0
      %v693 = vadd.f32 %v534, 1.0
      %v694 = vadd.f32 %v536, 1.0
      %v695 = vadd.f32 %v538, 1.0
      %v696 = vadd.f32 %v540, 1.0
      %v697 = vadd.f32 %v542, 1.0
      %v698 = vadd.f32 %v544, 1.0
      %v699 = vadd.f32 %v546, 1.0
      %v700 = vadd.f32 %v548, 1.0
      %v701 = vadd.f32 %v550, 1.0
      %v702 = vadd.f32 %v552, 1.0
      %v703 = vadd.f32 %v554, 1.0
      %v704 = vadd.f32 %v556, 1.0
      %v705 = vadd.f32 %v558, 1.0
      %v706 = vadd.f32 %v560, 1.0
      %v707 = vadd.f32 %v562, 1.0
      %v708 = vadd.f32 %v564, 1.0
      %v709 = vadd.f32 %v566, 1.0
      %v710 = vadd.f32 %v568, 1.0
      %v711 = vadd.f32 %v570, 1.0
      %v712 = vadd.f32 %v572, 1.0
      %v713 = vadd.f32 %v574, 1.0
      %v714 = vadd.f32 %v576, 1.0
      %v715 = vadd.f32 %v578, 1.0
      %v716 = vadd.f32 %v580, 1.0
      %v717 = vadd.f32 %v582, 1.0
      %v718 = vadd.f32 %v584, 1.0
      %v719 = vadd.f32 %v586, 1.0
      %v720 = vadd.f32 %v588, 1.0
      %v721 = vadd.f32 %v590, 1.0
      %v722 = vadd.f32 %v592, 1.0
      %v723 = vadd.f32 %v594, 1.0
      %v724 = vadd.f32 %v596, 1.0
      %v725 = vadd.f32 %v598, 1.0
      %v726 = vadd.f32 %v600, 1.0
      %v727 = vadd.f32 %v602, 1.0
      %v728 = vadd.f32 %v604, 1.0
      %v729 = vadd.f32 %v606, 1.0
      %v730 = vadd.f32 %v608, 1.0
      %v731 = vadd.f32 %v610, 1.0
      %v732 = vadd.f32 %v612, 1.0
      %v733 = vadd.f32 %v614, 1.0
      %v734 = vadd.f32 %v616, 1.0
      %v735 = vadd.f32 %v618, 1.0
      %v736 = vadd.f32 %v620, 1.0
      %v737 = vadd.f32 %v622, 1.0
      %v738 = vadd.f32 %v624, 1.0
      %v739 = vrcp.pop %v625
      %v740 = vrcp.pop %v626
      %v741 = vrcp.pop %v627
      %v742 = vrcp.pop %v628
      %v743 = vrcp.pop %v629
      %v744 = vrcp.pop %v630
      %v745 = vrcp.pop %v631
      %v746 = vrcp.pop %v632
      %v747 = vrcp.pop %v633
      %v748 = vrcp.pop %v634
      %v749 = vrcp.pop %v635
      %v750 = vrcp.pop %v636
      %v751 = vrcp.pop %v637
      %v752 = vrcp.pop %v638
      %v753 = vrcp.pop %v639
      %v754 = vrcp.pop %v640
      %v755 = vrcp.pop %v641
      %v756 = vrcp.pop %v642
      %v757 = vrcp.pop %v643
      %v758 = vrcp.pop %v644
      %v759 = vrcp.pop %v645
      %v760 = vrcp.pop %v646
      %v761 = vrcp.pop %v647
      %v762 = vrcp.pop %v648
      %v763 = vrcp.pop %v649
      %v764 = vrcp.pop %v650
      %v765 = vrcp.pop %v651
      %v766 = vrcp.pop %v652
      %v767 = vrcp.pop %v653
      %v768 = vrcp.pop %v654
      %v769 = vrcp.pop %v655
      %v770 = vrcp.pop %v656
      %v771 = vrcp.pop %v657
      %v772 = vrcp.pop %v658
      %v773 = vrcp.pop %v659
      %v774 = vrcp.pop %v660
      %v775 = vrcp.pop %v661
      %v776 = vrcp.pop %v662
      %v777 = vrcp.pop %v663
      %v778 = vrcp.pop %v664
      %v779 = vrcp.pop %v665
      %v780 = vrcp.pop %v666
      %v781 = vrcp.pop %v667
      %v782 = vrcp.pop %v668
      %v783 = vrcp.pop %v669
      %v784 = vrcp.pop %v670
      %v785 = vrcp.pop %v671
      %v786 = vrcp.pop %v672
      %v787 = vrcp.pop %v673
      %v788 = vrcp.pop %v674
      %v789 = vrcp.pop %v675
      %v790 = vrcp.pop %v676
      %v791 = vrcp.pop %v677
      %v792 = vrcp.pop %v678
      %v793 = vrcp.pop %v679
      %v794 = vrcp.pop %v680
      %v795 = vrcp.pop %v681
      %v796 = vrcp.pop %v682
      %v797 = vrcp.pop %v683
      %v798 = vrcp.pop %v684
      %v799 = vrcp.pop %v685
      %v800 = vrcp.pop %v686
      %v801 = vrcp.pop %v687
      %v802 = vrcp.pop %v688
      %v803 = vrcp.pop %v689
      %v804 = vrcp.pop %v690
      %v805 = vrcp.pop %v691
      %v806 = vrcp.pop %v692
      %v807 = vrcp.pop %v693
      %v808 = vrcp.pop %v694
      %v809 = vrcp.pop %v695
      %v810 = vrcp.pop %v696
      %v811 = vrcp.pop %v697
      %v812 = vrcp.pop %v698
      %v813 = vrcp.pop %v699
      %v814 = vrcp.pop %v700
      %v815 = vrcp.pop %v701
      %v816 = vrcp.pop %v702
      %v817 = vrcp.pop %v703
      %v818 = vrcp.pop %v704
      %v819 = vrcp.pop %v705
      %v820 = vrcp.pop %v706
      %v821 = vrcp.pop %v707
      %v822 = vrcp.pop %v708
      %v823 = vrcp.pop %v709
      %v824 = vrcp.pop %v710
      %v825 = vrcp.pop %v711
      %v826 = vrcp.pop %v712
      %v827 = vrcp.pop %v713
      %v828 = vrcp.pop %v714
      %v829 = vrcp.pop %v715
      %v830 = vrcp.pop %v716
      %v831 = vrcp.pop %v717
      %v832 = vrcp.pop %v718
      %v833 = vrcp.pop %v719
      %v834 = vrcp.pop %v720
      %v835 = vrcp.pop %v721
      %v836 = vrcp.pop %v722
      %v837 = vrcp.pop %v723
      %v838 = vrcp.pop %v724
      %v839 = vrcp.pop %v725
      %v840 = vrcp.pop %v726
      %v841 = vrcp.pop %v727
      %v842 = vrcp.pop %v728
      %v843 = vrcp.pop %v729
      %v844 = vrcp.pop %v730
      %v845 = vrcp.pop %v731
      %v846 = vrcp.pop %v732
      %v847 = vrcp.pop %v733
      %v848 = vrcp.pop %v734
      %v849 = vrcp.pop %v735
      %v850 = vrcp.pop %v736
      %v851 = vrcp.pop %v737
      %v852 = vrcp.pop %v738
      %v853 = vld [vmem:[%s161] sm:$0xff]
      %v854 = vld [vmem:[%s161 + $0x8] sm:$0xff]
      %v855 = vld [vmem:[%s161 + $0x10] sm:$0xff]
      %v856 = vld [vmem:[%s161 + $0x18] sm:$0xff]
      %v857 = vld [vmem:[%s161 + $0x20] sm:$0xff]
      %v858 = vld [vmem:[%s161 + $0x28] sm:$0xff]
      %v859 = vld [vmem:[%s161 + $0x30] sm:$0xff]
      %v860 = vld [vmem:[%s161 + $0x38] sm:$0xff]
      %v861 = vld [vmem:[%s161 + $0x40] sm:$0xff]
      %v862 = vld [vmem:[%s161 + $0x48] sm:$0xff]
      %v863 = vld [vmem:[%s161 + $0x50] sm:$0xff]
      %v864 = vld [vmem:[%s161 + $0x58] sm:$0xff]
      %v865 = vld [vmem:[%s161 + $0x60] sm:$0xff]
      %v866 = vld [vmem:[%s161 + $0x68] sm:$0xff]
      %v867 = vld [vmem:[%s161 + $0x70] sm:$0xff]
      %v868 = vld [vmem:[%s161 + $0x78] sm:$0xff]
      %v869 = vld [vmem:[%s161 + $0x80] sm:$0xff]
      %v870 = vld [vmem:[%s161 + $0x88] sm:$0xff]
      %v871 = vld [vmem:[%s161 + $0x90] sm:$0xff]
      %v872 = vld [vmem:[%s161 + $0x98] sm:$0xff]
      %v873 = vld [vmem:[%s161 + $0xa0] sm:$0xff]
      %v874 = vld [vmem:[%s161 + $0xa8] sm:$0xff]
      %v875 = vld [vmem:[%s161 + $0xb0] sm:$0xff]
      %v876 = vld [vmem:[%s161 + $0xb8] sm:$0xff]
      %v877 = vld [vmem:[%s161 + $0xc0] sm:$0xff]
      %v878 = vld [vmem:[%s161 + $0xc8] sm:$0xff]
      %v879 = vld [vmem:[%s161 + $0xd0] sm:$0xff]
      %v880 = vld [vmem:[%s161 + $0xd8] sm:$0xff]
      %v881 = vld [vmem:[%s161 + $0xe0] sm:$0xff]
      %v882 = vld [vmem:[%s161 + $0xe8] sm:$0xff]
      %v883 = vld [vmem:[%s161 + $0xf0] sm:$0xff]
      %v884 = vld [vmem:[%s161 + $0xf8] sm:$0xff]
      %v885 = vld [vmem:[%s161 + $0x100] sm:$0xff]
      %v886 = vld [vmem:[%s161 + $0x108] sm:$0xff]
      %v887 = vld [vmem:[%s161 + $0x110] sm:$0xff]
      %v888 = vld [vmem:[%s161 + $0x118] sm:$0xff]
      %v889 = vld [vmem:[%s161 + $0x120] sm:$0xff]
      %v890 = vld [vmem:[%s161 + $0x128] sm:$0xff]
      %v891 = vld [vmem:[%s161 + $0x130] sm:$0xff]
      %v892 = vld [vmem:[%s161 + $0x138] sm:$0xff]
      %v893 = vld [vmem:[%s161 + $0x140] sm:$0xff]
      %v894 = vld [vmem:[%s161 + $0x148] sm:$0xff]
      %v895 = vld [vmem:[%s161 + $0x150] sm:$0xff]
      %v896 = vld [vmem:[%s161 + $0x158] sm:$0xff]
      %v897 = vld [vmem:[%s161 + $0x160] sm:$0xff]
      %v898 = vld [vmem:[%s161 + $0x168] sm:$0xff]
      %v899 = vld [vmem:[%s161 + $0x170] sm:$0xff]
      %v900 = vld [vmem:[%s161 + $0x178] sm:$0xff]
      %v901 = vld [vmem:[%s161 + $0x180] sm:$0xff]
      %v902 = vld [vmem:[%s161 + $0x188] sm:$0xff]
      %v903 = vld [vmem:[%s161 + $0x190] sm:$0xff]
      %v904 = vld [vmem:[%s161 + $0x198] sm:$0xff]
      %v905 = vld [vmem:[%s161 + $0x1a0] sm:$0xff]
      %v906 = vld [vmem:[%s161 + $0x1a8] sm:$0xff]
      %v907 = vld [vmem:[%s161 + $0x1b0] sm:$0xff]
      %v908 = vld [vmem:[%s161 + $0x1b8] sm:$0xff]
      %v909 = vld [vmem:[%s161 + $0x1c0] sm:$0xff]
      %v910 = vld [vmem:[%s161 + $0x1c8] sm:$0xff]
      %v911 = vld [vmem:[%s161 + $0x1d0] sm:$0xff]
      %v912 = vld [vmem:[%s161 + $0x1d8] sm:$0xff]
      %v913 = vld [vmem:[%s161 + $0x1e0] sm:$0xff]
      %v914 = vld [vmem:[%s161 + $0x1e8] sm:$0xff]
      %v915 = vld [vmem:[%s161 + $0x1f0] sm:$0xff]
      %v916 = vld [vmem:[%s161 + $0x1f8] sm:$0xff]
      %v917 = vld [vmem:[%s161 + $0x200] sm:$0xff]
      %v918 = vld [vmem:[%s161 + $0x208] sm:$0xff]
      %v919 = vld [vmem:[%s161 + $0x210] sm:$0xff]
      %v920 = vld [vmem:[%s161 + $0x218] sm:$0xff]
      %v921 = vld [vmem:[%s161 + $0x220] sm:$0xff]
      %v922 = vld [vmem:[%s161 + $0x228] sm:$0xff]
      %v923 = vld [vmem:[%s161 + $0x230] sm:$0xff]
      %v924 = vld [vmem:[%s161 + $0x238] sm:$0xff]
      %v925 = vld [vmem:[%s161 + $0x240] sm:$0xff]
      %v926 = vld [vmem:[%s161 + $0x248] sm:$0xff]
      %v927 = vld [vmem:[%s161 + $0x250] sm:$0xff]
      %v928 = vld [vmem:[%s161 + $0x258] sm:$0xff]
      %v929 = vld [vmem:[%s161 + $0x260] sm:$0xff]
      %v930 = vld [vmem:[%s161 + $0x268] sm:$0xff]
      %v931 = vld [vmem:[%s161 + $0x270] sm:$0xff]
      %v932 = vld [vmem:[%s161 + $0x278] sm:$0xff]
      %v933 = vld [vmem:[%s161 + $0x280] sm:$0xff]
      %v934 = vld [vmem:[%s161 + $0x288] sm:$0xff]
      %v935 = vld [vmem:[%s161 + $0x290] sm:$0xff]
      %v936 = vld [vmem:[%s161 + $0x298] sm:$0xff]
      %v937 = vld [vmem:[%s161 + $0x2a0] sm:$0xff]
      %v938 = vld [vmem:[%s161 + $0x2a8] sm:$0xff]
      %v939 = vld [vmem:[%s161 + $0x2b0] sm:$0xff]
      %v940 = vld [vmem:[%s161 + $0x2b8] sm:$0xff]
      %v941 = vld [vmem:[%s161 + $0x2c0] sm:$0xff]
      %v942 = vld [vmem:[%s161 + $0x2c8] sm:$0xff]
      %v943 = vld [vmem:[%s161 + $0x2d0] sm:$0xff]
      %v944 = vld [vmem:[%s161 + $0x2d8] sm:$0xff]
      %v945 = vld [vmem:[%s161 + $0x2e0] sm:$0xff]
      %v946 = vld [vmem:[%s161 + $0x2e8] sm:$0xff]
      %v947 = vld [vmem:[%s161 + $0x2f0] sm:$0xff]
      %v948 = vld [vmem:[%s161 + $0x2f8] sm:$0xff]
      %v949 = vld [vmem:[%s161 + $0x300] sm:$0xff]
      %v950 = vld [vmem:[%s161 + $0x308] sm:$0xff]
      %v951 = vld [vmem:[%s161 + $0x310] sm:$0xff]
      %v952 = vld [vmem:[%s161 + $0x318] sm:$0xff]
      %v953 = vld [vmem:[%s161 + $0x320] sm:$0xff]
      %v954 = vld [vmem:[%s161 + $0x328] sm:$0xff]
      %v955 = vld [vmem:[%s161 + $0x330] sm:$0xff]
      %v956 = vld [vmem:[%s161 + $0x338] sm:$0xff]
      %v957 = vld [vmem:[%s161 + $0x340] sm:$0xff]
      %v958 = vld [vmem:[%s161 + $0x348] sm:$0xff]
      %v959 = vld [vmem:[%s161 + $0x350] sm:$0xff]
      %v960 = vld [vmem:[%s161 + $0x358] sm:$0xff]
      %v961 = vld [vmem:[%s161 + $0x360] sm:$0xff]
      %v962 = vld [vmem:[%s161 + $0x368] sm:$0xff]
      %v963 = vld [vmem:[%s161 + $0x370] sm:$0xff]
      %v964 = vld [vmem:[%s161 + $0x378] sm:$0xff]
      %v965 = vld [vmem:[%s161 + $0x380] sm:$0xff]
      %v966 = vld [vmem:[%s161 + $0x388] sm:$0xff]
      %968 = vset.pattern.permute.xlu0 0
      %969 = vperm.xlu0 %968, %v739
      %v970 = vpop.permute.xlu0 %969
      %973 = vset.pattern.permute.xlu0 0
      %974 = vperm.xlu0 %973, %v740
      %v975 = vpop.permute.xlu0 %974
      %978 = vset.pattern.permute.xlu0 0
      %979 = vperm.xlu0 %978, %v741
      %v980 = vpop.permute.xlu0 %979
      %983 = vset.pattern.permute.xlu0 0
      %984 = vperm.xlu0 %983, %v742
      %v985 = vpop.permute.xlu0 %984
      %988 = vset.pattern.permute.xlu0 0
      %989 = vperm.xlu0 %988, %v743
      %v990 = vpop.permute.xlu0 %989
      %993 = vset.pattern.permute.xlu0 0
      %994 = vperm.xlu0 %993, %v744
      %v995 = vpop.permute.xlu0 %994
      %998 = vset.pattern.permute.xlu0 0
      %999 = vperm.xlu0 %998, %v745
      %v1000 = vpop.permute.xlu0 %999
      %1003 = vset.pattern.permute.xlu0 0
      %1004 = vperm.xlu0 %1003, %v746
      %v1005 = vpop.permute.xlu0 %1004
      %1008 = vset.pattern.permute.xlu0 0
      %1009 = vperm.xlu0 %1008, %v747
      %v1010 = vpop.permute.xlu0 %1009
      %1013 = vset.pattern.permute.xlu0 0
      %1014 = vperm.xlu0 %1013, %v748
      %v1015 = vpop.permute.xlu0 %1014
      %1018 = vset.pattern.permute.xlu0 0
      %1019 = vperm.xlu0 %1018, %v749
      %v1020 = vpop.permute.xlu0 %1019
      %1023 = vset.pattern.permute.xlu0 0
      %1024 = vperm.xlu0 %1023, %v750
      %v1025 = vpop.permute.xlu0 %1024
      %1028 = vset.pattern.permute.xlu0 0
      %1029 = vperm.xlu0 %1028, %v751
      %v1030 = vpop.permute.xlu0 %1029
      %1033 = vset.pattern.permute.xlu0 0
      %1034 = vperm.xlu0 %1033, %v752
      %v1035 = vpop.permute.xlu0 %1034
      %1038 = vset.pattern.permute.xlu0 0
      %1039 = vperm.xlu0 %1038, %v753
      %v1040 = vpop.permute.xlu0 %1039
      %1043 = vset.pattern.permute.xlu0 0
      %1044 = vperm.xlu0 %1043, %v754
      %v1045 = vpop.permute.xlu0 %1044
      %1048 = vset.pattern.permute.xlu0 0
      %1049 = vperm.xlu0 %1048, %v755
      %v1050 = vpop.permute.xlu0 %1049
      %1053 = vset.pattern.permute.xlu0 0
      %1054 = vperm.xlu0 %1053, %v756
      %v1055 = vpop.permute.xlu0 %1054
      %1058 = vset.pattern.permute.xlu0 0
      %1059 = vperm.xlu0 %1058, %v757
      %v1060 = vpop.permute.xlu0 %1059
      %1063 = vset.pattern.permute.xlu0 0
      %1064 = vperm.xlu0 %1063, %v758
      %v1065 = vpop.permute.xlu0 %1064
      %1068 = vset.pattern.permute.xlu0 0
      %1069 = vperm.xlu0 %1068, %v759
      %v1070 = vpop.permute.xlu0 %1069
      %1073 = vset.pattern.permute.xlu0 0
      %1074 = vperm.xlu0 %1073, %v760
      %v1075 = vpop.permute.xlu0 %1074
      %1078 = vset.pattern.permute.xlu0 0
      %1079 = vperm.xlu0 %1078, %v761
      %v1080 = vpop.permute.xlu0 %1079
      %1083 = vset.pattern.permute.xlu0 0
      %1084 = vperm.xlu0 %1083, %v762
      %v1085 = vpop.permute.xlu0 %1084
      %1088 = vset.pattern.permute.xlu0 0
      %1089 = vperm.xlu0 %1088, %v763
      %v1090 = vpop.permute.xlu0 %1089
      %1093 = vset.pattern.permute.xlu0 0
      %1094 = vperm.xlu0 %1093, %v764
      %v1095 = vpop.permute.xlu0 %1094
      %1098 = vset.pattern.permute.xlu0 0
      %1099 = vperm.xlu0 %1098, %v765
      %v1100 = vpop.permute.xlu0 %1099
      %1103 = vset.pattern.permute.xlu0 0
      %1104 = vperm.xlu0 %1103, %v766
      %v1105 = vpop.permute.xlu0 %1104
      %1108 = vset.pattern.permute.xlu0 0
      %1109 = vperm.xlu0 %1108, %v767
      %v1110 = vpop.permute.xlu0 %1109
      %1113 = vset.pattern.permute.xlu0 0
      %1114 = vperm.xlu0 %1113, %v768
      %v1115 = vpop.permute.xlu0 %1114
      %1118 = vset.pattern.permute.xlu0 0
      %1119 = vperm.xlu0 %1118, %v769
      %v1120 = vpop.permute.xlu0 %1119
      %1123 = vset.pattern.permute.xlu0 0
      %1124 = vperm.xlu0 %1123, %v770
      %v1125 = vpop.permute.xlu0 %1124
      %1128 = vset.pattern.permute.xlu0 0
      %1129 = vperm.xlu0 %1128, %v771
      %v1130 = vpop.permute.xlu0 %1129
      %1133 = vset.pattern.permute.xlu0 0
      %1134 = vperm.xlu0 %1133, %v772
      %v1135 = vpop.permute.xlu0 %1134
      %1138 = vset.pattern.permute.xlu0 0
      %1139 = vperm.xlu0 %1138, %v773
      %v1140 = vpop.permute.xlu0 %1139
      %1143 = vset.pattern.permute.xlu0 0
      %1144 = vperm.xlu0 %1143, %v774
      %v1145 = vpop.permute.xlu0 %1144
      %1148 = vset.pattern.permute.xlu0 0
      %1149 = vperm.xlu0 %1148, %v775
      %v1150 = vpop.permute.xlu0 %1149
      %1153 = vset.pattern.permute.xlu0 0
      %1154 = vperm.xlu0 %1153, %v776
      %v1155 = vpop.permute.xlu0 %1154
      %1158 = vset.pattern.permute.xlu0 0
      %1159 = vperm.xlu0 %1158, %v777
      %v1160 = vpop.permute.xlu0 %1159
      %1163 = vset.pattern.permute.xlu0 0
      %1164 = vperm.xlu0 %1163, %v778
      %v1165 = vpop.permute.xlu0 %1164
      %1168 = vset.pattern.permute.xlu0 0
      %1169 = vperm.xlu0 %1168, %v779
      %v1170 = vpop.permute.xlu0 %1169
      %1173 = vset.pattern.permute.xlu0 0
      %1174 = vperm.xlu0 %1173, %v780
      %v1175 = vpop.permute.xlu0 %1174
      %1178 = vset.pattern.permute.xlu0 0
      %1179 = vperm.xlu0 %1178, %v781
      %v1180 = vpop.permute.xlu0 %1179
      %1183 = vset.pattern.permute.xlu0 0
      %1184 = vperm.xlu0 %1183, %v782
      %v1185 = vpop.permute.xlu0 %1184
      %1188 = vset.pattern.permute.xlu0 0
      %1189 = vperm.xlu0 %1188, %v783
      %v1190 = vpop.permute.xlu0 %1189
      %1193 = vset.pattern.permute.xlu0 0
      %1194 = vperm.xlu0 %1193, %v784
      %v1195 = vpop.permute.xlu0 %1194
      %1198 = vset.pattern.permute.xlu0 0
      %1199 = vperm.xlu0 %1198, %v785
      %v1200 = vpop.permute.xlu0 %1199
      %1203 = vset.pattern.permute.xlu0 0
      %1204 = vperm.xlu0 %1203, %v786
      %v1205 = vpop.permute.xlu0 %1204
      %1208 = vset.pattern.permute.xlu0 0
      %1209 = vperm.xlu0 %1208, %v787
      %v1210 = vpop.permute.xlu0 %1209
      %1213 = vset.pattern.permute.xlu0 0
      %1214 = vperm.xlu0 %1213, %v788
      %v1215 = vpop.permute.xlu0 %1214
      %1218 = vset.pattern.permute.xlu0 0
      %1219 = vperm.xlu0 %1218, %v789
      %v1220 = vpop.permute.xlu0 %1219
      %1223 = vset.pattern.permute.xlu0 0
      %1224 = vperm.xlu0 %1223, %v790
      %v1225 = vpop.permute.xlu0 %1224
      %1228 = vset.pattern.permute.xlu0 0
      %1229 = vperm.xlu0 %1228, %v791
      %v1230 = vpop.permute.xlu0 %1229
      %1233 = vset.pattern.permute.xlu0 0
      %1234 = vperm.xlu0 %1233, %v792
      %v1235 = vpop.permute.xlu0 %1234
      %1238 = vset.pattern.permute.xlu0 0
      %1239 = vperm.xlu0 %1238, %v793
      %v1240 = vpop.permute.xlu0 %1239
      %1243 = vset.pattern.permute.xlu0 0
      %1244 = vperm.xlu0 %1243, %v794
      %v1245 = vpop.permute.xlu0 %1244
      %1248 = vset.pattern.permute.xlu0 0
      %1249 = vperm.xlu0 %1248, %v795
      %v1250 = vpop.permute.xlu0 %1249
      %1253 = vset.pattern.permute.xlu0 0
      %1254 = vperm.xlu0 %1253, %v796
      %v1255 = vpop.permute.xlu0 %1254
      %1258 = vset.pattern.permute.xlu0 0
      %1259 = vperm.xlu0 %1258, %v797
      %v1260 = vpop.permute.xlu0 %1259
      %1263 = vset.pattern.permute.xlu0 0
      %1264 = vperm.xlu0 %1263, %v798
      %v1265 = vpop.permute.xlu0 %1264
      %1268 = vset.pattern.permute.xlu0 0
      %1269 = vperm.xlu0 %1268, %v799
      %v1270 = vpop.permute.xlu0 %1269
      %1273 = vset.pattern.permute.xlu0 0
      %1274 = vperm.xlu0 %1273, %v800
      %v1275 = vpop.permute.xlu0 %1274
      %1278 = vset.pattern.permute.xlu0 0
      %1279 = vperm.xlu0 %1278, %v801
      %v1280 = vpop.permute.xlu0 %1279
      %1283 = vset.pattern.permute.xlu0 0
      %1284 = vperm.xlu0 %1283, %v802
      %v1285 = vpop.permute.xlu0 %1284
      %1288 = vset.pattern.permute.xlu0 0
      %1289 = vperm.xlu0 %1288, %v803
      %v1290 = vpop.permute.xlu0 %1289
      %1293 = vset.pattern.permute.xlu0 0
      %1294 = vperm.xlu0 %1293, %v804
      %v1295 = vpop.permute.xlu0 %1294
      %1298 = vset.pattern.permute.xlu0 0
      %1299 = vperm.xlu0 %1298, %v805
      %v1300 = vpop.permute.xlu0 %1299
      %1303 = vset.pattern.permute.xlu0 0
      %1304 = vperm.xlu0 %1303, %v806
      %v1305 = vpop.permute.xlu0 %1304
      %1308 = vset.pattern.permute.xlu0 0
      %1309 = vperm.xlu0 %1308, %v807
      %v1310 = vpop.permute.xlu0 %1309
      %1313 = vset.pattern.permute.xlu0 0
      %1314 = vperm.xlu0 %1313, %v808
      %v1315 = vpop.permute.xlu0 %1314
      %1318 = vset.pattern.permute.xlu0 0
      %1319 = vperm.xlu0 %1318, %v809
      %v1320 = vpop.permute.xlu0 %1319
      %1323 = vset.pattern.permute.xlu0 0
      %1324 = vperm.xlu0 %1323, %v810
      %v1325 = vpop.permute.xlu0 %1324
      %1328 = vset.pattern.permute.xlu0 0
      %1329 = vperm.xlu0 %1328, %v811
      %v1330 = vpop.permute.xlu0 %1329
      %1333 = vset.pattern.permute.xlu0 0
      %1334 = vperm.xlu0 %1333, %v812
      %v1335 = vpop.permute.xlu0 %1334
      %1338 = vset.pattern.permute.xlu0 0
      %1339 = vperm.xlu0 %1338, %v813
      %v1340 = vpop.permute.xlu0 %1339
      %1343 = vset.pattern.permute.xlu0 0
      %1344 = vperm.xlu0 %1343, %v814
      %v1345 = vpop.permute.xlu0 %1344
      %1348 = vset.pattern.permute.xlu0 0
      %1349 = vperm.xlu0 %1348, %v815
      %v1350 = vpop.permute.xlu0 %1349
      %1353 = vset.pattern.permute.xlu0 0
      %1354 = vperm.xlu0 %1353, %v816
      %v1355 = vpop.permute.xlu0 %1354
      %1358 = vset.pattern.permute.xlu0 0
      %1359 = vperm.xlu0 %1358, %v817
      %v1360 = vpop.permute.xlu0 %1359
      %1363 = vset.pattern.permute.xlu0 0
      %1364 = vperm.xlu0 %1363, %v818
      %v1365 = vpop.permute.xlu0 %1364
      %1368 = vset.pattern.permute.xlu0 0
      %1369 = vperm.xlu0 %1368, %v819
      %v1370 = vpop.permute.xlu0 %1369
      %1373 = vset.pattern.permute.xlu0 0
      %1374 = vperm.xlu0 %1373, %v820
      %v1375 = vpop.permute.xlu0 %1374
      %1378 = vset.pattern.permute.xlu0 0
      %1379 = vperm.xlu0 %1378, %v821
      %v1380 = vpop.permute.xlu0 %1379
      %1383 = vset.pattern.permute.xlu0 0
      %1384 = vperm.xlu0 %1383, %v822
      %v1385 = vpop.permute.xlu0 %1384
      %1388 = vset.pattern.permute.xlu0 0
      %1389 = vperm.xlu0 %1388, %v823
      %v1390 = vpop.permute.xlu0 %1389
      %1393 = vset.pattern.permute.xlu0 0
      %1394 = vperm.xlu0 %1393, %v824
      %v1395 = vpop.permute.xlu0 %1394
      %1398 = vset.pattern.permute.xlu0 0
      %1399 = vperm.xlu0 %1398, %v825
      %v1400 = vpop.permute.xlu0 %1399
      %1403 = vset.pattern.permute.xlu0 0
      %1404 = vperm.xlu0 %1403, %v826
      %v1405 = vpop.permute.xlu0 %1404
      %1408 = vset.pattern.permute.xlu0 0
      %1409 = vperm.xlu0 %1408, %v827
      %v1410 = vpop.permute.xlu0 %1409
      %1413 = vset.pattern.permute.xlu0 0
      %1414 = vperm.xlu0 %1413, %v828
      %v1415 = vpop.permute.xlu0 %1414
      %1418 = vset.pattern.permute.xlu0 0
      %1419 = vperm.xlu0 %1418, %v829
      %v1420 = vpop.permute.xlu0 %1419
      %1423 = vset.pattern.permute.xlu0 0
      %1424 = vperm.xlu0 %1423, %v830
      %v1425 = vpop.permute.xlu0 %1424
      %1428 = vset.pattern.permute.xlu0 0
      %1429 = vperm.xlu0 %1428, %v831
      %v1430 = vpop.permute.xlu0 %1429
      %1433 = vset.pattern.permute.xlu0 0
      %1434 = vperm.xlu0 %1433, %v832
      %v1435 = vpop.permute.xlu0 %1434
      %1438 = vset.pattern.permute.xlu0 0
      %1439 = vperm.xlu0 %1438, %v833
      %v1440 = vpop.permute.xlu0 %1439
      %1443 = vset.pattern.permute.xlu0 0
      %1444 = vperm.xlu0 %1443, %v834
      %v1445 = vpop.permute.xlu0 %1444
      %1448 = vset.pattern.permute.xlu0 0
      %1449 = vperm.xlu0 %1448, %v835
      %v1450 = vpop.permute.xlu0 %1449
      %1453 = vset.pattern.permute.xlu0 0
      %1454 = vperm.xlu0 %1453, %v836
      %v1455 = vpop.permute.xlu0 %1454
      %1458 = vset.pattern.permute.xlu0 0
      %1459 = vperm.xlu0 %1458, %v837
      %v1460 = vpop.permute.xlu0 %1459
      %1463 = vset.pattern.permute.xlu0 0
      %1464 = vperm.xlu0 %1463, %v838
      %v1465 = vpop.permute.xlu0 %1464
      %1468 = vset.pattern.permute.xlu0 0
      %1469 = vperm.xlu0 %1468, %v839
      %v1470 = vpop.permute.xlu0 %1469
      %1473 = vset.pattern.permute.xlu0 0
      %1474 = vperm.xlu0 %1473, %v840
      %v1475 = vpop.permute.xlu0 %1474
      %1478 = vset.pattern.permute.xlu0 0
      %1479 = vperm.xlu0 %1478, %v841
      %v1480 = vpop.permute.xlu0 %1479
      %1483 = vset.pattern.permute.xlu0 0
      %1484 = vperm.xlu0 %1483, %v842
      %v1485 = vpop.permute.xlu0 %1484
      %1488 = vset.pattern.permute.xlu0 0
      %1489 = vperm.xlu0 %1488, %v843
      %v1490 = vpop.permute.xlu0 %1489
      %1493 = vset.pattern.permute.xlu0 0
      %1494 = vperm.xlu0 %1493, %v844
      %v1495 = vpop.permute.xlu0 %1494
      %1498 = vset.pattern.permute.xlu0 0
      %1499 = vperm.xlu0 %1498, %v845
      %v1500 = vpop.permute.xlu0 %1499
      %1503 = vset.pattern.permute.xlu0 0
      %1504 = vperm.xlu0 %1503, %v846
      %v1505 = vpop.permute.xlu0 %1504
      %1508 = vset.pattern.permute.xlu0 0
      %1509 = vperm.xlu0 %1508, %v847
      %v1510 = vpop.permute.xlu0 %1509
      %1513 = vset.pattern.permute.xlu0 0
      %1514 = vperm.xlu0 %1513, %v848
      %v1515 = vpop.permute.xlu0 %1514
      %1518 = vset.pattern.permute.xlu0 0
      %1519 = vperm.xlu0 %1518, %v849
      %v1520 = vpop.permute.xlu0 %1519
      %1523 = vset.pattern.permute.xlu0 0
      %1524 = vperm.xlu0 %1523, %v850
      %v1525 = vpop.permute.xlu0 %1524
      %1528 = vset.pattern.permute.xlu0 0
      %1529 = vperm.xlu0 %1528, %v851
      %v1530 = vpop.permute.xlu0 %1529
      %1533 = vset.pattern.permute.xlu0 0
      %1534 = vperm.xlu0 %1533, %v852
      %v1535 = vpop.permute.xlu0 %1534
      %v1537 = vmul.f32 %v970, %v853
      %v1538 = vmul.f32 %v975, %v854
      %v1539 = vmul.f32 %v980, %v855
      %v1540 = vmul.f32 %v985, %v856
      %v1541 = vmul.f32 %v990, %v857
      %v1542 = vmul.f32 %v995, %v858
      %v1543 = vmul.f32 %v1000, %v859
      %v1544 = vmul.f32 %v1005, %v860
      %v1545 = vmul.f32 %v1010, %v861
      %v1546 = vmul.f32 %v1015, %v862
      %v1547 = vmul.f32 %v1020, %v863
      %v1548 = vmul.f32 %v1025, %v864
      %v1549 = vmul.f32 %v1030, %v865
      %v1550 = vmul.f32 %v1035, %v866
      %v1551 = vmul.f32 %v1040, %v867
      %v1552 = vmul.f32 %v1045, %v868
      %v1553 = vmul.f32 %v1050, %v869
      %v1554 = vmul.f32 %v1055, %v870
      %v1555 = vmul.f32 %v1060, %v871
      %v1556 = vmul.f32 %v1065, %v872
      %v1557 = vmul.f32 %v1070, %v873
      %v1558 = vmul.f32 %v1075, %v874
      %v1559 = vmul.f32 %v1080, %v875
      %v1560 = vmul.f32 %v1085, %v876
      %v1561 = vmul.f32 %v1090, %v877
      %v1562 = vmul.f32 %v1095, %v878
      %v1563 = vmul.f32 %v1100, %v879
      %v1564 = vmul.f32 %v1105, %v880
      %v1565 = vmul.f32 %v1110, %v881
      %v1566 = vmul.f32 %v1115, %v882
      %v1567 = vmul.f32 %v1120, %v883
      %v1568 = vmul.f32 %v1125, %v884
      %v1569 = vmul.f32 %v1130, %v885
      %v1570 = vmul.f32 %v1135, %v886
      %v1571 = vmul.f32 %v1140, %v887
      %v1572 = vmul.f32 %v1145, %v888
      %v1573 = vmul.f32 %v1150, %v889
      %v1574 = vmul.f32 %v1155, %v890
      %v1575 = vmul.f32 %v1160, %v891
      %v1576 = vmul.f32 %v1165, %v892
      %v1577 = vmul.f32 %v1170, %v893
      %v1578 = vmul.f32 %v1175, %v894
      %v1579 = vmul.f32 %v1180, %v895
      %v1580 = vmul.f32 %v1185, %v896
      %v1581 = vmul.f32 %v1190, %v897
      %v1582 = vmul.f32 %v1195, %v898
      %v1583 = vmul.f32 %v1200, %v899
      %v1584 = vmul.f32 %v1205, %v900
      %v1585 = vmul.f32 %v1210, %v901
      %v1586 = vmul.f32 %v1215, %v902
      %v1587 = vmul.f32 %v1220, %v903
      %v1588 = vmul.f32 %v1225, %v904
      %v1589 = vmul.f32 %v1230, %v905
      %v1590 = vmul.f32 %v1235, %v906
      %v1591 = vmul.f32 %v1240, %v907
      %v1592 = vmul.f32 %v1245, %v908
      %v1593 = vmul.f32 %v1250, %v909
      %v1594 = vmul.f32 %v1255, %v910
      %v1595 = vmul.f32 %v1260, %v911
      %v1596 = vmul.f32 %v1265, %v912
      %v1597 = vmul.f32 %v1270, %v913
      %v1598 = vmul.f32 %v1275, %v914
      %v1599 = vmul.f32 %v1280, %v915
      %v1600 = vmul.f32 %v1285, %v916
      %v1601 = vmul.f32 %v1290, %v917
      %v1602 = vmul.f32 %v1295, %v918
      %v1603 = vmul.f32 %v1300, %v919
      %v1604 = vmul.f32 %v1305, %v920
      %v1605 = vmul.f32 %v1310, %v921
      %v1606 = vmul.f32 %v1315, %v922
      %v1607 = vmul.f32 %v1320, %v923
      %v1608 = vmul.f32 %v1325, %v924
      %v1609 = vmul.f32 %v1330, %v925
      %v1610 = vmul.f32 %v1335, %v926
      %v1611 = vmul.f32 %v1340, %v927
      %v1612 = vmul.f32 %v1345, %v928
      %v1613 = vmul.f32 %v1350, %v929
      %v1614 = vmul.f32 %v1355, %v930
      %v1615 = vmul.f32 %v1360, %v931
      %v1616 = vmul.f32 %v1365, %v932
      %v1617 = vmul.f32 %v1370, %v933
      %v1618 = vmul.f32 %v1375, %v934
      %v1619 = vmul.f32 %v1380, %v935
      %v1620 = vmul.f32 %v1385, %v936
      %v1621 = vmul.f32 %v1390, %v937
      %v1622 = vmul.f32 %v1395, %v938
      %v1623 = vmul.f32 %v1400, %v939
      %v1624 = vmul.f32 %v1405, %v940
      %v1625 = vmul.f32 %v1410, %v941
      %v1626 = vmul.f32 %v1415, %v942
      %v1627 = vmul.f32 %v1420, %v943
      %v1628 = vmul.f32 %v1425, %v944
      %v1629 = vmul.f32 %v1430, %v945
      %v1630 = vmul.f32 %v1435, %v946
      %v1631 = vmul.f32 %v1440, %v947
      %v1632 = vmul.f32 %v1445, %v948
      %v1633 = vmul.f32 %v1450, %v949
      %v1634 = vmul.f32 %v1455, %v950
      %v1635 = vmul.f32 %v1460, %v951
      %v1636 = vmul.f32 %v1465, %v952
      %v1637 = vmul.f32 %v1470, %v953
      %v1638 = vmul.f32 %v1475, %v954
      %v1639 = vmul.f32 %v1480, %v955
      %v1640 = vmul.f32 %v1485, %v956
      %v1641 = vmul.f32 %v1490, %v957
      %v1642 = vmul.f32 %v1495, %v958
      %v1643 = vmul.f32 %v1500, %v959
      %v1644 = vmul.f32 %v1505, %v960
      %v1645 = vmul.f32 %v1510, %v961
      %v1646 = vmul.f32 %v1515, %v962
      %v1647 = vmul.f32 %v1520, %v963
      %v1648 = vmul.f32 %v1525, %v964
      %v1649 = vmul.f32 %v1530, %v965
      %v1650 = vmul.f32 %v1535, %v966
      %vm1651 = vcmask 400384
      %1652 = vst.msk [vmem:[%s167] sm:$0xff] %vm1651, %v1537
      %1653 = vst.msk [vmem:[%s167 + $0x8] sm:$0xff] %vm1651, %v1538
      %1654 = vst.msk [vmem:[%s167 + $0x10] sm:$0xff] %vm1651, %v1539
      %1655 = vst.msk [vmem:[%s167 + $0x18] sm:$0xff] %vm1651, %v1540
      %1656 = vst.msk [vmem:[%s167 + $0x20] sm:$0xff] %vm1651, %v1541
      %1657 = vst.msk [vmem:[%s167 + $0x28] sm:$0xff] %vm1651, %v1542
      %1658 = vst.msk [vmem:[%s167 + $0x30] sm:$0xff] %vm1651, %v1543
      %1659 = vst.msk [vmem:[%s167 + $0x38] sm:$0xff] %vm1651, %v1544
      %1660 = vst.msk [vmem:[%s167 + $0x40] sm:$0xff] %vm1651, %v1545
      %1661 = vst.msk [vmem:[%s167 + $0x48] sm:$0xff] %vm1651, %v1546
      %1662 = vst.msk [vmem:[%s167 + $0x50] sm:$0xff] %vm1651, %v1547
      %1663 = vst.msk [vmem:[%s167 + $0x58] sm:$0xff] %vm1651, %v1548
      %1664 = vst.msk [vmem:[%s167 + $0x60] sm:$0xff] %vm1651, %v1549
      %1665 = vst.msk [vmem:[%s167 + $0x68] sm:$0xff] %vm1651, %v1550
      %1666 = vst.msk [vmem:[%s167 + $0x70] sm:$0xff] %vm1651, %v1551
      %1667 = vst.msk [vmem:[%s167 + $0x78] sm:$0xff] %vm1651, %v1552
      %1668 = vst.msk [vmem:[%s167 + $0x80] sm:$0xff] %vm1651, %v1553
      %1669 = vst.msk [vmem:[%s167 + $0x88] sm:$0xff] %vm1651, %v1554
      %1670 = vst.msk [vmem:[%s167 + $0x90] sm:$0xff] %vm1651, %v1555
      %1671 = vst.msk [vmem:[%s167 + $0x98] sm:$0xff] %vm1651, %v1556
      %1672 = vst.msk [vmem:[%s167 + $0xa0] sm:$0xff] %vm1651, %v1557
      %1673 = vst.msk [vmem:[%s167 + $0xa8] sm:$0xff] %vm1651, %v1558
      %1674 = vst.msk [vmem:[%s167 + $0xb0] sm:$0xff] %vm1651, %v1559
      %1675 = vst.msk [vmem:[%s167 + $0xb8] sm:$0xff] %vm1651, %v1560
      %1676 = vst.msk [vmem:[%s167 + $0xc0] sm:$0xff] %vm1651, %v1561
      %1677 = vst.msk [vmem:[%s167 + $0xc8] sm:$0xff] %vm1651, %v1562
      %1678 = vst.msk [vmem:[%s167 + $0xd0] sm:$0xff] %vm1651, %v1563
      %1679 = vst.msk [vmem:[%s167 + $0xd8] sm:$0xff] %vm1651, %v1564
      %1680 = vst.msk [vmem:[%s167 + $0xe0] sm:$0xff] %vm1651, %v1565
      %1681 = vst.msk [vmem:[%s167 + $0xe8] sm:$0xff] %vm1651, %v1566
      %1682 = vst.msk [vmem:[%s167 + $0xf0] sm:$0xff] %vm1651, %v1567
      %1683 = vst.msk [vmem:[%s167 + $0xf8] sm:$0xff] %vm1651, %v1568
      %1684 = vst.msk [vmem:[%s167 + $0x100] sm:$0xff] %vm1651, %v1569
      %1685 = vst.msk [vmem:[%s167 + $0x108] sm:$0xff] %vm1651, %v1570
      %1686 = vst.msk [vmem:[%s167 + $0x110] sm:$0xff] %vm1651, %v1571
      %1687 = vst.msk [vmem:[%s167 + $0x118] sm:$0xff] %vm1651, %v1572
      %1688 = vst.msk [vmem:[%s167 + $0x120] sm:$0xff] %vm1651, %v1573
      %1689 = vst.msk [vmem:[%s167 + $0x128] sm:$0xff] %vm1651, %v1574
      %1690 = vst.msk [vmem:[%s167 + $0x130] sm:$0xff] %vm1651, %v1575
      %1691 = vst.msk [vmem:[%s167 + $0x138] sm:$0xff] %vm1651, %v1576
      %1692 = vst.msk [vmem:[%s167 + $0x140] sm:$0xff] %vm1651, %v1577
      %1693 = vst.msk [vmem:[%s167 + $0x148] sm:$0xff] %vm1651, %v1578
      %1694 = vst.msk [vmem:[%s167 + $0x150] sm:$0xff] %vm1651, %v1579
      %1695 = vst.msk [vmem:[%s167 + $0x158] sm:$0xff] %vm1651, %v1580
      %1696 = vst.msk [vmem:[%s167 + $0x160] sm:$0xff] %vm1651, %v1581
      %1697 = vst.msk [vmem:[%s167 + $0x168] sm:$0xff] %vm1651, %v1582
      %1698 = vst.msk [vmem:[%s167 + $0x170] sm:$0xff] %vm1651, %v1583
      %1699 = vst.msk [vmem:[%s167 + $0x178] sm:$0xff] %vm1651, %v1584
      %1700 = vst.msk [vmem:[%s167 + $0x180] sm:$0xff] %vm1651, %v1585
      %1701 = vst.msk [vmem:[%s167 + $0x188] sm:$0xff] %vm1651, %v1586
      %1702 = vst.msk [vmem:[%s167 + $0x190] sm:$0xff] %vm1651, %v1587
      %1703 = vst.msk [vmem:[%s167 + $0x198] sm:$0xff] %vm1651, %v1588
      %1704 = vst.msk [vmem:[%s167 + $0x1a0] sm:$0xff] %vm1651, %v1589
      %1705 = vst.msk [vmem:[%s167 + $0x1a8] sm:$0xff] %vm1651, %v1590
      %1706 = vst.msk [vmem:[%s167 + $0x1b0] sm:$0xff] %vm1651, %v1591
      %1707 = vst.msk [vmem:[%s167 + $0x1b8] sm:$0xff] %vm1651, %v1592
      %1708 = vst.msk [vmem:[%s167 + $0x1c0] sm:$0xff] %vm1651, %v1593
      %1709 = vst.msk [vmem:[%s167 + $0x1c8] sm:$0xff] %vm1651, %v1594
      %1710 = vst.msk [vmem:[%s167 + $0x1d0] sm:$0xff] %vm1651, %v1595
      %1711 = vst.msk [vmem:[%s167 + $0x1d8] sm:$0xff] %vm1651, %v1596
      %1712 = vst.msk [vmem:[%s167 + $0x1e0] sm:$0xff] %vm1651, %v1597
      %1713 = vst.msk [vmem:[%s167 + $0x1e8] sm:$0xff] %vm1651, %v1598
      %1714 = vst.msk [vmem:[%s167 + $0x1f0] sm:$0xff] %vm1651, %v1599
      %1715 = vst.msk [vmem:[%s167 + $0x1f8] sm:$0xff] %vm1651, %v1600
      %1716 = vst.msk [vmem:[%s167 + $0x200] sm:$0xff] %vm1651, %v1601
      %1717 = vst.msk [vmem:[%s167 + $0x208] sm:$0xff] %vm1651, %v1602
      %1718 = vst.msk [vmem:[%s167 + $0x210] sm:$0xff] %vm1651, %v1603
      %1719 = vst.msk [vmem:[%s167 + $0x218] sm:$0xff] %vm1651, %v1604
      %1720 = vst.msk [vmem:[%s167 + $0x220] sm:$0xff] %vm1651, %v1605
      %1721 = vst.msk [vmem:[%s167 + $0x228] sm:$0xff] %vm1651, %v1606
      %1722 = vst.msk [vmem:[%s167 + $0x230] sm:$0xff] %vm1651, %v1607
      %1723 = vst.msk [vmem:[%s167 + $0x238] sm:$0xff] %vm1651, %v1608
      %1724 = vst.msk [vmem:[%s167 + $0x240] sm:$0xff] %vm1651, %v1609
      %1725 = vst.msk [vmem:[%s167 + $0x248] sm:$0xff] %vm1651, %v1610
      %1726 = vst.msk [vmem:[%s167 + $0x250] sm:$0xff] %vm1651, %v1611
      %1727 = vst.msk [vmem:[%s167 + $0x258] sm:$0xff] %vm1651, %v1612
      %1728 = vst.msk [vmem:[%s167 + $0x260] sm:$0xff] %vm1651, %v1613
      %1729 = vst.msk [vmem:[%s167 + $0x268] sm:$0xff] %vm1651, %v1614
      %1730 = vst.msk [vmem:[%s167 + $0x270] sm:$0xff] %vm1651, %v1615
      %1731 = vst.msk [vmem:[%s167 + $0x278] sm:$0xff] %vm1651, %v1616
      %1732 = vst.msk [vmem:[%s167 + $0x280] sm:$0xff] %vm1651, %v1617
      %1733 = vst.msk [vmem:[%s167 + $0x288] sm:$0xff] %vm1651, %v1618
      %1734 = vst.msk [vmem:[%s167 + $0x290] sm:$0xff] %vm1651, %v1619
      %1735 = vst.msk [vmem:[%s167 + $0x298] sm:$0xff] %vm1651, %v1620
      %1736 = vst.msk [vmem:[%s167 + $0x2a0] sm:$0xff] %vm1651, %v1621
      %1737 = vst.msk [vmem:[%s167 + $0x2a8] sm:$0xff] %vm1651, %v1622
      %1738 = vst.msk [vmem:[%s167 + $0x2b0] sm:$0xff] %vm1651, %v1623
      %1739 = vst.msk [vmem:[%s167 + $0x2b8] sm:$0xff] %vm1651, %v1624
      %1740 = vst.msk [vmem:[%s167 + $0x2c0] sm:$0xff] %vm1651, %v1625
      %1741 = vst.msk [vmem:[%s167 + $0x2c8] sm:$0xff] %vm1651, %v1626
      %1742 = vst.msk [vmem:[%s167 + $0x2d0] sm:$0xff] %vm1651, %v1627
      %1743 = vst.msk [vmem:[%s167 + $0x2d8] sm:$0xff] %vm1651, %v1628
      %1744 = vst.msk [vmem:[%s167 + $0x2e0] sm:$0xff] %vm1651, %v1629
      %1745 = vst.msk [vmem:[%s167 + $0x2e8] sm:$0xff] %vm1651, %v1630
      %1746 = vst.msk [vmem:[%s167 + $0x2f0] sm:$0xff] %vm1651, %v1631
      %1747 = vst.msk [vmem:[%s167 + $0x2f8] sm:$0xff] %vm1651, %v1632
      %1748 = vst.msk [vmem:[%s167 + $0x300] sm:$0xff] %vm1651, %v1633
      %1749 = vst.msk [vmem:[%s167 + $0x308] sm:$0xff] %vm1651, %v1634
      %1750 = vst.msk [vmem:[%s167 + $0x310] sm:$0xff] %vm1651, %v1635
      %1751 = vst.msk [vmem:[%s167 + $0x318] sm:$0xff] %vm1651, %v1636
      %1752 = vst.msk [vmem:[%s167 + $0x320] sm:$0xff] %vm1651, %v1637
      %1753 = vst.msk [vmem:[%s167 + $0x328] sm:$0xff] %vm1651, %v1638
      %1754 = vst.msk [vmem:[%s167 + $0x330] sm:$0xff] %vm1651, %v1639
      %1755 = vst.msk [vmem:[%s167 + $0x338] sm:$0xff] %vm1651, %v1640
      %1756 = vst.msk [vmem:[%s167 + $0x340] sm:$0xff] %vm1651, %v1641
      %1757 = vst.msk [vmem:[%s167 + $0x348] sm:$0xff] %vm1651, %v1642
      %1758 = vst.msk [vmem:[%s167 + $0x350] sm:$0xff] %vm1651, %v1643
      %1759 = vst.msk [vmem:[%s167 + $0x358] sm:$0xff] %vm1651, %v1644
      %1760 = vst.msk [vmem:[%s167 + $0x360] sm:$0xff] %vm1651, %v1645
      %1761 = vst.msk [vmem:[%s167 + $0x368] sm:$0xff] %vm1651, %v1646
      %1762 = vst.msk [vmem:[%s167 + $0x370] sm:$0xff] %vm1651, %v1647
      %1763 = vst.msk [vmem:[%s167 + $0x378] sm:$0xff] %vm1651, %v1648
      %1764 = vst.msk [vmem:[%s167 + $0x380] sm:$0xff] %vm1651, %v1649
      %1765 = vst.msk [vmem:[%s167 + $0x388] sm:$0xff] %vm1651, %v1650
      %s1766 = smul.u32 114, %s13
      %p1767 = scmp.lt.s32.totalorder %s1766, 227
      %s1768 = scalar_select %p1767, %s1766, 227
      %s1769 = smul.addr %s1768, 8
      %s1770 = scalar_lea.vmem %s2, %s1769
      // Predicated region
      $region29: #{tpu_custom_call.1} parent=27 // pred_check
        %p1771 = pneg %p83
      $region30: #{tpu_custom_call.1} parent=27 // pred_check_branch
        %1773 = sbr.rel (%p1771) target = $region32
      $region31: #{tpu_custom_call.1} parent=27 // pred_region
        %s1774 = smul.u32 114, %s13
      $region32: #{tpu_custom_call.1} parent=27 // pred_fallthru
        _
    $region28: #{tpu_custom_call.1} parent=5 // pred_fallthru
      _
    %p1775 = scmp.le.s32.totalorder 2, %s8
    // Predicated region
    $region33: #{tpu_custom_call.1} parent=5 // pred_check
      %p1776 = pneg %p1775
    $region34: #{tpu_custom_call.1} parent=5 // pred_check_branch
      %1778 = sbr.rel (%p1776) target = $region36
    $region35: #{tpu_custom_call.1} parent=5 // pred_region
      %s1779 = ssub.s32 %s8, 2
      // Predicated region
      $region37: #{tpu_custom_call.1} parent=35 // pred_check
        %p1780 = pneg %p89
      $region38: #{tpu_custom_call.1} parent=35 // pred_check_branch
        %1782 = sbr.rel (%p1780) target = $region40
      $region39: #{tpu_custom_call.1} parent=35 // pred_region
        %s1783 = smul.u32 114, %s14
        %p1784 = scmp.lt.s32.totalorder %s1783, 227
        %s1785 = scalar_select %p1784, %s1783, 227
        %s1786 = smul.addr %s1785, 8
        %s1787 = scalar_lea.vmem %s2, %s1786
      $region40: #{tpu_custom_call.1} parent=35 // pred_fallthru
        _
    $region36: #{tpu_custom_call.1} parent=5 // pred_fallthru
      _
  $region6: #{tpu_custom_call.1} parent=0 // loop_footer
    %s12 = sadd.s32 1, %s8
  $region7: #{tpu_custom_call.1} parent=0 // loop_footer_branch
    %7 = sbr.rel target = $region3
  $region8: #{tpu_custom_call.1} parent=0 // loop_exit
    _

</llo_original>
